<compile_context>
chip_gen: v7x
topology: tpu7x:2x2x1
jax: 0.10.0
libtpu: 0.0.40
codegen_flags: <defaults>
</compile_context>

<pallas_src>
import functools
import math

import jax
import jax.numpy as jnp
from jax.experimental import pallas as pl
from jax.experimental.pallas import tpu as pltpu


# ------------------------------- tiling helpers ----------------------------- #

# Generation-aware caps: 512-tiles keep double-buffered bf16 operands + the f32
# accumulator under ~8 MiB per linear, safe for v7x (64 MiB VMEM) and v5e/v6e (128 MiB).
_TM_CAP = 512
_TN_CAP = 512
_TK_CAP = 512
_VMEM_LIMIT = 48 * 1024 * 1024


def _pick_tile(dim, cap, align):
    """Largest tile <= cap that is a multiple of `align` and divides `dim`.
    Falls back to the full dim when dim is small or has no aligned divisor."""
    if dim <= cap:
        return dim
    t = (cap // align) * align
    while t >= align:
        if dim % t == 0:
            return t
        t -= align
    return dim


def _mosaic(sems):
    return pltpu.CompilerParams(dimension_semantics=sems,
                                vmem_limit_bytes=_VMEM_LIMIT)


def _round_up(x, m):
    return ((x + m - 1) // m) * m


def _erf_poly(x):
    # Abramowitz & Stegun 7.1.26, |error| < 1.5e-7: exact-GELU (erf) semantics
    # matching torch.nn.GELU default, without relying on a compiler erf lowering.
    a1, a2, a3, a4, a5 = 0.254829592, -0.284496736, 1.421413741, -1.453152027, 1.061405429
    p = 0.3275911
    ax = jnp.abs(x)
    t = 1.0 / (1.0 + p * ax)
    poly = ((((a5 * t + a4) * t + a3) * t + a2) * t + a1) * t
    y = 1.0 - poly * jnp.exp(-ax * ax)
    return jnp.where(x >= 0, y, -y)


def _gelu_exact(x):
    return 0.5 * x * (1.0 + _erf_poly(x * (1.0 / math.sqrt(2.0))))


# ------------------------------ Pallas kernels ------------------------------ #

def _matmul_kernel(x_ref, w_ref, b_ref, o_ref, acc_ref, *, activation):
    @pl.when(pl.program_id(2) == 0)
    def _():
        acc_ref[...] = jnp.zeros_like(acc_ref)

    acc_ref[...] += jnp.dot(x_ref[...], w_ref[...],
                            preferred_element_type=jnp.float32)

    @pl.when(pl.program_id(2) == pl.num_programs(2) - 1)
    def _():
        y = acc_ref[...] + b_ref[...]
        if activation == "gelu":
            y = _gelu_exact(y)
        o_ref[...] = y.astype(o_ref.dtype)


def linear(x, w, b, activation=None, out_dtype=jnp.bfloat16):
    """x:[M,K] bf16, w:[K,N] bf16, b:[N] f32 -> [M,N]. Tiled, pipelined MXU matmul."""
    M, K = x.shape
    _, N = w.shape
    tm = _pick_tile(M, _TM_CAP, 8)
    tn = _pick_tile(N, _TN_CAP, 128)
    tk = _pick_tile(K, _TK_CAP, 128)
    kern = functools.partial(_matmul_kernel, activation=activation)
    return pl.pallas_call(
        kern,
        out_shape=jax.ShapeDtypeStruct((M, N), out_dtype),
        grid_spec=pltpu.PrefetchScalarGridSpec(
            num_scalar_prefetch=0,
            grid=(M // tm, N // tn, K // tk),
            in_specs=[
                pl.BlockSpec((tm, tk), lambda i, j, k: (i, k)),
                pl.BlockSpec((tk, tn), lambda i, j, k: (k, j)),
                pl.BlockSpec((1, tn), lambda i, j, k: (0, j)),
            ],
            out_specs=pl.BlockSpec((tm, tn), lambda i, j, k: (i, j)),
            scratch_shapes=[pltpu.VMEM((tm, tn), jnp.float32)],
        ),
        compiler_params=_mosaic(("parallel", "parallel", "arbitrary")),
    )(x, w, b.reshape(1, N))


def _matmul_res_ln_kernel(x_ref, w_ref, b_ref, r_ref, g_ref, be_ref, o_ref, acc_ref):
    @pl.when(pl.program_id(1) == 0)
    def _():
        acc_ref[...] = jnp.zeros_like(acc_ref)

    acc_ref[...] += jnp.dot(x_ref[...], w_ref[...],
                            preferred_element_type=jnp.float32)

    @pl.when(pl.program_id(1) == pl.num_programs(1) - 1)
    def _():
        # residual add + LayerNorm fused into the matmul epilogue (eps=1e-5).
        z = acc_ref[...] + b_ref[...] + r_ref[...].astype(jnp.float32)
        mean = jnp.mean(z, axis=-1, keepdims=True)
        var = jnp.mean((z - mean) ** 2, axis=-1, keepdims=True)
        zn = (z - mean) * jax.lax.rsqrt(var + 1e-5)
        o_ref[...] = (zn * g_ref[...] + be_ref[...]).astype(o_ref.dtype)


def linear_residual_ln(x, w, b, residual, gamma, beta, out_dtype=jnp.bfloat16):
    """LayerNorm(residual + x @ w + b). Output dim N (= d_model) is kept whole so the
    LN reduction stays inside the output tile."""
    M, K = x.shape
    _, N = w.shape
    tm = _pick_tile(M, _TM_CAP, 8)
    tk = _pick_tile(K, _TK_CAP, 128)
    return pl.pallas_call(
        _matmul_res_ln_kernel,
        out_shape=jax.ShapeDtypeStruct((M, N), out_dtype),
        grid_spec=pltpu.PrefetchScalarGridSpec(
            num_scalar_prefetch=0,
            grid=(M // tm, K // tk),
            in_specs=[
                pl.BlockSpec((tm, tk), lambda i, k: (i, k)),
                pl.BlockSpec((tk, N), lambda i, k: (k, 0)),
                pl.BlockSpec((1, N), lambda i, k: (0, 0)),
                pl.BlockSpec((tm, N), lambda i, k: (i, 0)),
                pl.BlockSpec((1, N), lambda i, k: (0, 0)),
                pl.BlockSpec((1, N), lambda i, k: (0, 0)),
            ],
            out_specs=pl.BlockSpec((tm, N), lambda i, k: (i, 0)),
            scratch_shapes=[pltpu.VMEM((tm, N), jnp.float32)],
        ),
        compiler_params=_mosaic(("parallel", "arbitrary")),
    )(x, w, b.reshape(1, N), residual, gamma.reshape(1, N), beta.reshape(1, N))


def _ln_kernel(x_ref, g_ref, b_ref, o_ref):
    z = x_ref[...].astype(jnp.float32)
    mean = jnp.mean(z, axis=-1, keepdims=True)
    var = jnp.mean((z - mean) ** 2, axis=-1, keepdims=True)
    zn = (z - mean) * jax.lax.rsqrt(var + 1e-5)
    o_ref[...] = (zn * g_ref[...] + b_ref[...]).astype(o_ref.dtype)


def layernorm(x, gamma, beta, out_dtype=jnp.bfloat16):
    """Row-tiled standalone LayerNorm (final ln_f)."""
    M, D = x.shape
    tm = _pick_tile(M, 1024, 8)
    return pl.pallas_call(
        _ln_kernel,
        out_shape=jax.ShapeDtypeStruct((M, D), out_dtype),
        grid_spec=pltpu.PrefetchScalarGridSpec(
            num_scalar_prefetch=0,
            grid=(M // tm,),
            in_specs=[
                pl.BlockSpec((tm, D), lambda i: (i, 0)),
                pl.BlockSpec((1, D), lambda i: (0, 0)),
                pl.BlockSpec((1, D), lambda i: (0, 0)),
            ],
            out_specs=pl.BlockSpec((tm, D), lambda i: (i, 0)),
        ),
        compiler_params=_mosaic(("parallel",)),
    )(x, gamma.reshape(1, D), beta.reshape(1, D))


def _mha_kernel(qkv_ref, o_ref, *, n_heads, d_model, scale):
    # qkv block: [1, S, 3D] bf16. Heads are sliced in-kernel (no XLA split_heads).
    qkv = qkv_ref[0]
    dh = d_model // n_heads
    q_all = qkv[:, :d_model] * scale          # fold softmax scale into q (S x Dh mul)
    k_all = qkv[:, d_model:2 * d_model]
    v_all = qkv[:, 2 * d_model:]
    for h in range(n_heads):
        lo = h * dh
        hi = lo + dh
        qh = q_all[:, lo:hi]
        kh = k_all[:, lo:hi]
        vh = v_all[:, lo:hi]
        # contract over Dh for both operands — no k.T transpose.
        s = jax.lax.dot_general(qh, kh, (((1,), (1,)), ((), ())),
                                preferred_element_type=jnp.float32)      # [S, S]
        m = jnp.max(s, axis=-1, keepdims=True)
        p = jnp.exp(s - m)
        p = p * pl.reciprocal(jnp.sum(p, axis=-1, keepdims=True), approx=True)
        oh = jnp.dot(p.astype(vh.dtype), vh, preferred_element_type=jnp.float32)
        o_ref[0, :, lo:hi] = oh.astype(o_ref.dtype)


def mha(qkv, n_heads, scale):
    """qkv: [B, S, 3D] bf16 -> [B, S, D] bf16 multi-head self-attention."""
    B, S, D3 = qkv.shape
    D = D3 // 3
    kern = functools.partial(_mha_kernel, n_heads=n_heads, d_model=D, scale=scale)
    # TODO(synk): for long sequences (esp. v7x 64 MiB VMEM), KV-tile this kernel
    # (flash-style online softmax) instead of materializing the full [S, S] scores.
    return pl.pallas_call(
        kern,
        out_shape=jax.ShapeDtypeStruct((B, S, D), jnp.bfloat16),
        grid_spec=pltpu.PrefetchScalarGridSpec(
            num_scalar_prefetch=0,
            grid=(B,),
            in_specs=[pl.BlockSpec((1, S, D3), lambda b: (b, 0, 0))],
            out_specs=pl.BlockSpec((1, S, D), lambda b: (b, 0, 0)),
        ),
        compiler_params=_mosaic(("parallel",)),
    )(qkv)


# --------------------------- parameters / glue ------------------------------ #

def sinusoidal_pe(context_size, d_model):
    pos = jnp.arange(context_size, dtype=jnp.float32)[:, None]
    i = jnp.arange(0, d_model, 2, dtype=jnp.float32)[None, :]
    div = jnp.exp(-math.log(10000.0) * i / d_model)
    pe = jnp.zeros((context_size, d_model), jnp.float32)
    pe = pe.at[:, 0::2].set(jnp.sin(pos * div))
    pe = pe.at[:, 1::2].set(jnp.cos(pos * div))
    return pe


def init_params(key, vocab_ext, vocab_orig, d_model, n_heads, d_ff, n_layers):
    keys = iter(jax.random.split(key, 8 + 8 * n_layers))

    def w(shape):
        # matmul weights kept in bf16 for the MXU path; accumulation stays f32.
        return (0.02 * jax.random.normal(next(keys), shape)).astype(jnp.bfloat16)

    vocab_pad = _round_up(vocab_orig, 128)   # lane-dense head stores; sliced in wrapper
    head_w = jnp.zeros((d_model, vocab_pad), jnp.bfloat16)
    head_w = head_w.at[:, :vocab_orig].set(w((d_model, vocab_orig)))

    params = {
        "emb": w((vocab_ext, d_model)),
        "blocks": [],
        "ln_f_g": jnp.ones((d_model,), jnp.float32),
        "ln_f_b": jnp.zeros((d_model,), jnp.float32),
        "head_w": head_w,
        "head_b": jnp.zeros((vocab_pad,), jnp.float32),
    }
    for _ in range(n_layers):
        blk = {
            # fused QKV projection: one [D, 3D] matmul instead of three [D, D]
            "wqkv": w((d_model, 3 * d_model)),
            "bqkv": jnp.zeros((3 * d_model,), jnp.float32),
            "wo": w((d_model, d_model)), "bo": jnp.zeros((d_model,), jnp.float32),
            "ln1_g": jnp.ones((d_model,), jnp.float32),
            "ln1_b": jnp.zeros((d_model,), jnp.float32),
            "w1": w((d_model, d_ff)), "b1": jnp.zeros((d_ff,), jnp.float32),
            "w2": w((d_ff, d_model)), "b2": jnp.zeros((d_model,), jnp.float32),
            "ln2_g": jnp.ones((d_model,), jnp.float32),
            "ln2_b": jnp.zeros((d_model,), jnp.float32),
        }
        params["blocks"].append(blk)
    return params


def bert_timeseries_forward(params, input_ids, pe, *, n_heads, vocab_orig):
    B, S = input_ids.shape
    D = params["emb"].shape[1]
    Dh = D // n_heads
    scale = 1.0 / math.sqrt(Dh)

    # token embedding gather + sinusoidal positional encoding (XLA glue).
    # TODO(synk): embedding gather stays in XLA; a Pallas DMA-gather adds little here.
    x = jnp.take(params["emb"], input_ids, axis=0)                        # [B, S, D] bf16
    x = (x.astype(jnp.float32) + pe[:S][None, :, :]).astype(jnp.bfloat16)
    # dropout: inference-mode identity
    x2d = x.reshape(B * S, D)

    for blk in params["blocks"]:
        # --- multi-head self-attention (post-LN block) ---
        qkv = linear(x2d, blk["wqkv"], blk["bqkv"])                       # [M, 3D] bf16
        a = mha(qkv.reshape(B, S, 3 * D), n_heads, scale)                 # [B, S, D] bf16
        x2d = linear_residual_ln(a.reshape(B * S, D), blk["wo"], blk["bo"],
                                 x2d, blk["ln1_g"], blk["ln1_b"])         # LN(x + attn)

        # --- feed-forward ---
        ff = linear(x2d, blk["w1"], blk["b1"], activation="gelu")         # [M, d_ff] bf16
        x2d = linear_residual_ln(ff, blk["w2"], blk["b2"],
                                 x2d, blk["ln2_g"], blk["ln2_b"])         # LN(x + ffn)

    xn = layernorm(x2d, params["ln_f_g"], params["ln_f_b"])
    logits = linear(xn, params["head_w"], params["head_b"], out_dtype=jnp.float32)
    return logits[:, :vocab_orig].reshape(B, S, vocab_orig)


# --------------------------------- main ------------------------------------ #

if __name__ == "__main__":
    # small config consistent with the module's structure
    orig_vocab_size = 64
    extended_vocab = orig_vocab_size + 2
    context_size = 8
    d_model = 32
    n_heads = 4
    d_ff = 64
    n_layers = 2
    B, S = 2, 8

    key = jax.random.PRNGKey(0)
    k_param, k_ids = jax.random.split(key)
    params = init_params(k_param, extended_vocab, orig_vocab_size,
                         d_model, n_heads, d_ff, n_layers)
    pe = sinusoidal_pe(context_size, d_model)
    input_ids = jax.random.randint(k_ids, (B, S), 0, orig_vocab_size, dtype=jnp.int32)

    fwd = jax.jit(functools.partial(bert_timeseries_forward,
                                    n_heads=n_heads, vocab_orig=orig_vocab_size))
    logits = fwd(params, input_ids, pe)
    jax.block_until_ready(logits)
    assert logits.shape == (B, S, orig_vocab_size)
    assert bool(jnp.all(jnp.isfinite(logits)))
    print("KERNEL_OK")
</pallas_src>

<mosaic_0001>
module attributes {stable_mosaic.version = 11 : i64} {
  func.func @_matmul_kernel(%arg0: i32, %arg1: i32, %arg2: i32, %arg3: memref<16x32xbf16, #tpu.memory_space<vmem>>, %arg4: memref<32x96xbf16, #tpu.memory_space<vmem>>, %arg5: memref<1x96xf32, #tpu.memory_space<vmem>>, %arg6: memref<16x96xbf16, #tpu.memory_space<vmem>>, %arg7: memref<16x96xf32, #tpu.memory_space<vmem>>) attributes {dimension_semantics = [#tpu.dimension_semantics<parallel>, #tpu.dimension_semantics<parallel>, #tpu.dimension_semantics<arbitrary>], iteration_bounds = array<i64: 1, 1, 1>, scalar_prefetch = 0 : i64, scratch_operands = 1 : i64, tpu.core_type = #tpu.core_type<tc>, window_params = [{transform_indices = @transform_0, window_bounds = array<i64: 16, 32>}, {transform_indices = @transform_1, window_bounds = array<i64: 32, 96>}, {transform_indices = @transform_2, window_bounds = array<i64: 1, 96>}, {transform_indices = @transform_3, window_bounds = array<i64: 16, 96>}]} {
    %c0_i32 = arith.constant 0 : i32
    %0 = arith.cmpi eq, %arg2, %c0_i32 : i32
    %1 = arith.extui %0 : i1 to i32
    %c0_i32_0 = arith.constant 0 : i32
    %2 = arith.cmpi ne, %1, %c0_i32_0 : i32
    scf.if %2 {
      %cst_10 = arith.constant 0.000000e+00 : f32
      %12 = vector.broadcast %cst_10 : f32 to vector<16x96xf32>
      %c0_11 = arith.constant 0 : index
      %c0_12 = arith.constant 0 : index
      %13 = vector.load %arg7[%c0_11, %c0_12] : memref<16x96xf32, #tpu.memory_space<vmem>>, vector<16x96xf32>
      tpu.vector_store %arg7[%c0_11, %c0_12], %12 {strides = array<i32>} : memref<16x96xf32, #tpu.memory_space<vmem>>, vector<16x96xf32>,
    } else {
    }
    %c0 = arith.constant 0 : index
    %c0_1 = arith.constant 0 : index
    %3 = vector.load %arg7[%c0, %c0_1] : memref<16x96xf32, #tpu.memory_space<vmem>>, vector<16x96xf32>
    %c0_2 = arith.constant 0 : index
    %c0_3 = arith.constant 0 : index
    %4 = vector.load %arg3[%c0_2, %c0_3] : memref<16x32xbf16, #tpu.memory_space<vmem>>, vector<16x32xbf16>
    %c0_4 = arith.constant 0 : index
    %c0_5 = arith.constant 0 : index
    %5 = vector.load %arg4[%c0_4, %c0_5] : memref<32x96xbf16, #tpu.memory_space<vmem>>, vector<32x96xbf16>
    %cst = arith.constant dense<0.000000e+00> : vector<16x96xf32>
    %6 = tpu.matmul %4, %5, %cst {dimension_numbers = #tpu.dot_dimension_numbers<[1], [0], [0], [1], [0, 0, 1, 1], [], []>} : vector<16x32xbf16>, vector<32x96xbf16>, vector<16x96xf32> -> vector<16x96xf32>
    %7 = arith.addf %3, %6 : vector<16x96xf32>
    %c0_6 = arith.constant 0 : index
    %c0_7 = arith.constant 0 : index
    %8 = vector.load %arg7[%c0_6, %c0_7] : memref<16x96xf32, #tpu.memory_space<vmem>>, vector<16x96xf32>
    tpu.vector_store %arg7[%c0_6, %c0_7], %7 {strides = array<i32>} : memref<16x96xf32, #tpu.memory_space<vmem>>, vector<16x96xf32>,
    %c0_i32_8 = arith.constant 0 : i32
    %9 = arith.cmpi eq, %arg2, %c0_i32_8 : i32
    %10 = arith.extui %9 : i1 to i32
    %c0_i32_9 = arith.constant 0 : i32
    %11 = arith.cmpi ne, %10, %c0_i32_9 : i32
    scf.if %11 {
      %c0_10 = arith.constant 0 : index
      %c0_11 = arith.constant 0 : index
      %12 = vector.load %arg7[%c0_10, %c0_11] : memref<16x96xf32, #tpu.memory_space<vmem>>, vector<16x96xf32>
      %c0_12 = arith.constant 0 : index
      %c0_13 = arith.constant 0 : index
      %13 = vector.load %arg5[%c0_12, %c0_13] : memref<1x96xf32, #tpu.memory_space<vmem>>, vector<1x96xf32>
      %14 = vector.broadcast %13 : vector<1x96xf32> to vector<16x96xf32>
      %15 = arith.addf %12, %14 : vector<16x96xf32>
      %16 = arith.truncf %15 : vector<16x96xf32> to vector<16x96xbf16>
      %c0_14 = arith.constant 0 : index
      %c0_15 = arith.constant 0 : index
      %17 = vector.load %arg6[%c0_14, %c0_15] : memref<16x96xbf16, #tpu.memory_space<vmem>>, vector<16x96xbf16>
      tpu.vector_store %arg6[%c0_14, %c0_15], %16 {strides = array<i32>} : memref<16x96xbf16, #tpu.memory_space<vmem>>, vector<16x96xbf16>,
    } else {
    }
    return
  }
  func.func @transform_0(%arg0: i32, %arg1: i32, %arg2: i32) -> (i32, i32) {
    %c0_i32 = arith.constant 0 : i32
    return %arg0, %arg2 : i32, i32
  }
  func.func @transform_1(%arg0: i32, %arg1: i32, %arg2: i32) -> (i32, i32) {
    %c0_i32 = arith.constant 0 : i32
    return %arg2, %arg1 : i32, i32
  }
  func.func @transform_2(%arg0: i32, %arg1: i32, %arg2: i32) -> (i32, i32) {
    %c0_i32 = arith.constant 0 : i32
    %c0_i32_0 = arith.constant 0 : i32
    return %c0_i32, %arg1 : i32, i32
  }
  func.func @transform_3(%arg0: i32, %arg1: i32, %arg2: i32) -> (i32, i32) {
    %c0_i32 = arith.constant 0 : i32
    return %arg0, %arg1 : i32, i32
  }
}

module attributes {stable_mosaic.version = 11 : i64} {
  func.func @_mha_kernel(%arg0: i32, %arg1: memref<1x8x96xbf16, #tpu.memory_space<vmem>>, %arg2: memref<1x8x32xbf16, #tpu.memory_space<vmem>>) attributes {dimension_semantics = [#tpu.dimension_semantics<parallel>], iteration_bounds = array<i64: 2>, scalar_prefetch = 0 : i64, scratch_operands = 0 : i64, tpu.core_type = #tpu.core_type<tc>, window_params = [{transform_indices = @transform_0, window_bounds = array<i64: 1, 8, 96>}, {transform_indices = @transform_1, window_bounds = array<i64: 1, 8, 32>}]} {
    %c0 = arith.constant 0 : index
    %c0_0 = arith.constant 0 : index
    %c0_1 = arith.constant 0 : index
    %0 = vector.load %arg1[%c0, %c0_0, %c0_1] : memref<1x8x96xbf16, #tpu.memory_space<vmem>>, vector<1x8x96xbf16>
    %1 = vector.shape_cast %0 : vector<1x8x96xbf16> to vector<8x96xbf16>
    %2 = vector.extract_strided_slice %1 {offsets = [0, 0], sizes = [8, 32], strides = [1, 1]} : vector<8x96xbf16> to vector<8x32xbf16>
    %cst = arith.constant 3.535160e-01 : bf16
    %3 = vector.broadcast %cst : bf16 to vector<8x32xbf16>
    %4 = arith.mulf %2, %3 : vector<8x32xbf16>
    %5 = vector.extract_strided_slice %1 {offsets = [0, 32], sizes = [8, 32], strides = [1, 1]} : vector<8x96xbf16> to vector<8x32xbf16>
    %6 = vector.extract_strided_slice %1 {offsets = [0, 64], sizes = [8, 32], strides = [1, 1]} : vector<8x96xbf16> to vector<8x32xbf16>
    %7 = vector.extract_strided_slice %4 {offsets = [0, 0], sizes = [8, 8], strides = [1, 1]} : vector<8x32xbf16> to vector<8x8xbf16>
    %8 = vector.extract_strided_slice %5 {offsets = [0, 0], sizes = [8, 8], strides = [1, 1]} : vector<8x32xbf16> to vector<8x8xbf16>
    %9 = vector.extract_strided_slice %6 {offsets = [0, 0], sizes = [8, 8], strides = [1, 1]} : vector<8x32xbf16> to vector<8x8xbf16>
    %cst_2 = arith.constant dense<0.000000e+00> : vector<8x8xf32>
    %10 = tpu.matmul %7, %8, %cst_2 {dimension_numbers = #tpu.dot_dimension_numbers<[1], [1], [0], [0], [0, 0, 1, 0], [], []>} : vector<8x8xbf16>, vector<8x8xbf16>, vector<8x8xf32> -> vector<8x8xf32>
    %cst_3 = arith.constant dense<0xFF800000> : vector<8xf32>
    %11 = vector.multi_reduction <maximumf>, %10, %cst_3 [1] : vector<8x8xf32> to vector<8xf32>
    %12 = vector.shape_cast %11 : vector<8xf32> to vector<8x1xf32>
    %13 = vector.broadcast %12 : vector<8x1xf32> to vector<8x8xf32>
    %14 = arith.subf %10, %13 : vector<8x8xf32>
    %15 = math.exp %14 : vector<8x8xf32>
    %cst_4 = arith.constant dense<0.000000e+00> : vector<8xf32>
    %16 = vector.multi_reduction <add>, %15, %cst_4 [1] : vector<8x8xf32> to vector<8xf32>
    %17 = vector.shape_cast %16 : vector<8xf32> to vector<8x1xf32>
    %18 = tpu.reciprocal %17 {approx = true} : vector<8x1xf32> -> vector<8x1xf32>
    %19 = vector.broadcast %18 : vector<8x1xf32> to vector<8x8xf32>
    %20 = arith.mulf %15, %19 : vector<8x8xf32>
    %21 = arith.truncf %20 : vector<8x8xf32> to vector<8x8xbf16>
    %cst_5 = arith.constant dense<0.000000e+00> : vector<8x8xf32>
    %22 = tpu.matmul %21, %9, %cst_5 {dimension_numbers = #tpu.dot_dimension_numbers<[1], [0], [0], [1], [0, 0, 1, 1], [], []>} : vector<8x8xbf16>, vector<8x8xbf16>, vector<8x8xf32> -> vector<8x8xf32>
    %23 = arith.truncf %22 : vector<8x8xf32> to vector<8x8xbf16>
    %c0_6 = arith.constant 0 : index
    %c0_7 = arith.constant 0 : index
    %c0_8 = arith.constant 0 : index
    %24 = vector.load %arg2[%c0_6, %c0_7, %c0_8] : memref<1x8x32xbf16, #tpu.memory_space<vmem>>, vector<1x8x8xbf16>
    %25 = vector.shape_cast %24 : vector<1x8x8xbf16> to vector<8x8xbf16>
    %26 = vector.shape_cast %23 : vector<8x8xbf16> to vector<1x8x8xbf16>
    tpu.vector_store %arg2[%c0_6, %c0_7, %c0_8], %26 {strides = array<i32>} : memref<1x8x32xbf16, #tpu.memory_space<vmem>>, vector<1x8x8xbf16>,
    %27 = vector.extract_strided_slice %4 {offsets = [0, 8], sizes = [8, 8], strides = [1, 1]} : vector<8x32xbf16> to vector<8x8xbf16>
    %28 = vector.extract_strided_slice %5 {offsets = [0, 8], sizes = [8, 8], strides = [1, 1]} : vector<8x32xbf16> to vector<8x8xbf16>
    %29 = vector.extract_strided_slice %6 {offsets = [0, 8], sizes = [8, 8], strides = [1, 1]} : vector<8x32xbf16> to vector<8x8xbf16>
    %cst_9 = arith.constant dense<0.000000e+00> : vector<8x8xf32>
    %30 = tpu.matmul %27, %28, %cst_9 {dimension_numbers = #tpu.dot_dimension_numbers<[1], [1], [0], [0], [0, 0, 1, 0], [], []>} : vector<8x8xbf16>, vector<8x8xbf16>, vector<8x8xf32> -> vector<8x8xf32>
    %cst_10 = arith.constant dense<0xFF800000> : vector<8xf32>
    %31 = vector.multi_reduction <maximumf>, %30, %cst_10 [1] : vector<8x8xf32> to vector<8xf32>
    %32 = vector.shape_cast %31 : vector<8xf32> to vector<8x1xf32>
    %33 = vector.broadcast %32 : vector<8x1xf32> to vector<8x8xf32>
    %34 = arith.subf %30, %33 : vector<8x8xf32>
    %35 = math.exp %34 : vector<8x8xf32>
    %cst_11 = arith.constant dense<0.000000e+00> : vector<8xf32>
    %36 = vector.multi_reduction <add>, %35, %cst_11 [1] : vector<8x8xf32> to vector<8xf32>
    %37 = vector.shape_cast %36 : vector<8xf32> to vector<8x1xf32>
    %38 = tpu.reciprocal %37 {approx = true} : vector<8x1xf32> -> vector<8x1xf32>
    %39 = vector.broadcast %38 : vector<8x1xf32> to vector<8x8xf32>
    %40 = arith.mulf %35, %39 : vector<8x8xf32>
    %41 = arith.truncf %40 : vector<8x8xf32> to vector<8x8xbf16>
    %cst_12 = arith.constant dense<0.000000e+00> : vector<8x8xf32>
    %42 = tpu.matmul %41, %29, %cst_12 {dimension_numbers = #tpu.dot_dimension_numbers<[1], [0], [0], [1], [0, 0, 1, 1], [], []>} : vector<8x8xbf16>, vector<8x8xbf16>, vector<8x8xf32> -> vector<8x8xf32>
    %43 = arith.truncf %42 : vector<8x8xf32> to vector<8x8xbf16>
    %c0_13 = arith.constant 0 : index
    %c0_14 = arith.constant 0 : index
    %c8 = arith.constant 8 : index
    %44 = vector.load %arg2[%c0_13, %c0_14, %c8] : memref<1x8x32xbf16, #tpu.memory_space<vmem>>, vector<1x8x8xbf16>
    %45 = vector.shape_cast %44 : vector<1x8x8xbf16> to vector<8x8xbf16>
    %46 = vector.shape_cast %43 : vector<8x8xbf16> to vector<1x8x8xbf16>
    tpu.vector_store %arg2[%c0_13, %c0_14, %c8], %46 {strides = array<i32>} : memref<1x8x32xbf16, #tpu.memory_space<vmem>>, vector<1x8x8xbf16>,
    %47 = vector.extract_strided_slice %4 {offsets = [0, 16], sizes = [8, 8], strides = [1, 1]} : vector<8x32xbf16> to vector<8x8xbf16>
    %48 = vector.extract_strided_slice %5 {offsets = [0, 16], sizes = [8, 8], strides = [1, 1]} : vector<8x32xbf16> to vector<8x8xbf16>
    %49 = vector.extract_strided_slice %6 {offsets = [0, 16], sizes = [8, 8], strides = [1, 1]} : vector<8x32xbf16> to vector<8x8xbf16>
    %cst_15 = arith.constant dense<0.000000e+00> : vector<8x8xf32>
    %50 = tpu.matmul %47, %48, %cst_15 {dimension_numbers = #tpu.dot_dimension_numbers<[1], [1], [0], [0], [0, 0, 1, 0], [], []>} : vector<8x8xbf16>, vector<8x8xbf16>, vector<8x8xf32> -> vector<8x8xf32>
    %cst_16 = arith.constant dense<0xFF800000> : vector<8xf32>
    %51 = vector.multi_reduction <maximumf>, %50, %cst_16 [1] : vector<8x8xf32> to vector<8xf32>
    %52 = vector.shape_cast %51 : vector<8xf32> to vector<8x1xf32>
    %53 = vector.broadcast %52 : vector<8x1xf32> to vector<8x8xf32>
    %54 = arith.subf %50, %53 : vector<8x8xf32>
    %55 = math.exp %54 : vector<8x8xf32>
    %cst_17 = arith.constant dense<0.000000e+00> : vector<8xf32>
    %56 = vector.multi_reduction <add>, %55, %cst_17 [1] : vector<8x8xf32> to vector<8xf32>
    %57 = vector.shape_cast %56 : vector<8xf32> to vector<8x1xf32>
    %58 = tpu.reciprocal %57 {approx = true} : vector<8x1xf32> -> vector<8x1xf32>
    %59 = vector.broadcast %58 : vector<8x1xf32> to vector<8x8xf32>
    %60 = arith.mulf %55, %59 : vector<8x8xf32>
    %61 = arith.truncf %60 : vector<8x8xf32> to vector<8x8xbf16>
    %cst_18 = arith.constant dense<0.000000e+00> : vector<8x8xf32>
    %62 = tpu.matmul %61, %49, %cst_18 {dimension_numbers = #tpu.dot_dimension_numbers<[1], [0], [0], [1], [0, 0, 1, 1], [], []>} : vector<8x8xbf16>, vector<8x8xbf16>, vector<8x8xf32> -> vector<8x8xf32>
    %63 = arith.truncf %62 : vector<8x8xf32> to vector<8x8xbf16>
    %c0_19 = arith.constant 0 : index
    %c0_20 = arith.constant 0 : index
    %c16 = arith.constant 16 : index
    %64 = vector.load %arg2[%c0_19, %c0_20, %c16] : memref<1x8x32xbf16, #tpu.memory_space<vmem>>, vector<1x8x8xbf16>
    %65 = vector.shape_cast %64 : vector<1x8x8xbf16> to vector<8x8xbf16>
    %66 = vector.shape_cast %63 : vector<8x8xbf16> to vector<1x8x8xbf16>
    tpu.vector_store %arg2[%c0_19, %c0_20, %c16], %66 {strides = array<i32>} : memref<1x8x32xbf16, #tpu.memory_space<vmem>>, vector<1x8x8xbf16>,
    %67 = vector.extract_strided_slice %4 {offsets = [0, 24], sizes = [8, 8], strides = [1, 1]} : vector<8x32xbf16> to vector<8x8xbf16>
    %68 = vector.extract_strided_slice %5 {offsets = [0, 24], sizes = [8, 8], strides = [1, 1]} : vector<8x32xbf16> to vector<8x8xbf16>
    %69 = vector.extract_strided_slice %6 {offsets = [0, 24], sizes = [8, 8], strides = [1, 1]} : vector<8x32xbf16> to vector<8x8xbf16>
    %cst_21 = arith.constant dense<0.000000e+00> : vector<8x8xf32>
    %70 = tpu.matmul %67, %68, %cst_21 {dimension_numbers = #tpu.dot_dimension_numbers<[1], [1], [0], [0], [0, 0, 1, 0], [], []>} : vector<8x8xbf16>, vector<8x8xbf16>, vector<8x8xf32> -> vector<8x8xf32>
    %cst_22 = arith.constant dense<0xFF800000> : vector<8xf32>
    %71 = vector.multi_reduction <maximumf>, %70, %cst_22 [1] : vector<8x8xf32> to vector<8xf32>
    %72 = vector.shape_cast %71 : vector<8xf32> to vector<8x1xf32>
    %73 = vector.broadcast %72 : vector<8x1xf32> to vector<8x8xf32>
    %74 = arith.subf %70, %73 : vector<8x8xf32>
    %75 = math.exp %74 : vector<8x8xf32>
    %cst_23 = arith.constant dense<0.000000e+00> : vector<8xf32>
    %76 = vector.multi_reduction <add>, %75, %cst_23 [1] : vector<8x8xf32> to vector<8xf32>
    %77 = vector.shape_cast %76 : vector<8xf32> to vector<8x1xf32>
    %78 = tpu.reciprocal %77 {approx = true} : vector<8x1xf32> -> vector<8x1xf32>
    %79 = vector.broadcast %78 : vector<8x1xf32> to vector<8x8xf32>
    %80 = arith.mulf %75, %79 : vector<8x8xf32>
    %81 = arith.truncf %80 : vector<8x8xf32> to vector<8x8xbf16>
    %cst_24 = arith.constant dense<0.000000e+00> : vector<8x8xf32>
    %82 = tpu.matmul %81, %69, %cst_24 {dimension_numbers = #tpu.dot_dimension_numbers<[1], [0], [0], [1], [0, 0, 1, 1], [], []>} : vector<8x8xbf16>, vector<8x8xbf16>, vector<8x8xf32> -> vector<8x8xf32>
    %83 = arith.truncf %82 : vector<8x8xf32> to vector<8x8xbf16>
    %c0_25 = arith.constant 0 : index
    %c0_26 = arith.constant 0 : index
    %c24 = arith.constant 24 : index
    %84 = vector.load %arg2[%c0_25, %c0_26, %c24] : memref<1x8x32xbf16, #tpu.memory_space<vmem>>, vector<1x8x8xbf16>
    %85 = vector.shape_cast %84 : vector<1x8x8xbf16> to vector<8x8xbf16>
    %86 = vector.shape_cast %83 : vector<8x8xbf16> to vector<1x8x8xbf16>
    tpu.vector_store %arg2[%c0_25, %c0_26, %c24], %86 {strides = array<i32>} : memref<1x8x32xbf16, #tpu.memory_space<vmem>>, vector<1x8x8xbf16>,
    return
  }
  func.func @transform_0(%arg0: i32) -> (i32, i32, i32) {
    %c0_i32 = arith.constant 0 : i32
    %c0_i32_0 = arith.constant 0 : i32
    %c0_i32_1 = arith.constant 0 : i32
    return %arg0, %c0_i32, %c0_i32_0 : i32, i32, i32
  }
  func.func @transform_1(%arg0: i32) -> (i32, i32, i32) {
    %c0_i32 = arith.constant 0 : i32
    %c0_i32_0 = arith.constant 0 : i32
    %c0_i32_1 = arith.constant 0 : i32
    return %arg0, %c0_i32, %c0_i32_0 : i32, i32, i32
  }
}

module attributes {stable_mosaic.version = 11 : i64} {
  func.func @_matmul_res_ln_kernel(%arg0: i32, %arg1: i32, %arg2: memref<16x32xbf16, #tpu.memory_space<vmem>>, %arg3: memref<32x32xbf16, #tpu.memory_space<vmem>>, %arg4: memref<1x32xf32, #tpu.memory_space<vmem>>, %arg5: memref<16x32xbf16, #tpu.memory_space<vmem>>, %arg6: memref<1x32xf32, #tpu.memory_space<vmem>>, %arg7: memref<1x32xf32, #tpu.memory_space<vmem>>, %arg8: memref<16x32xbf16, #tpu.memory_space<vmem>>, %arg9: memref<16x32xf32, #tpu.memory_space<vmem>>) attributes {dimension_semantics = [#tpu.dimension_semantics<parallel>, #tpu.dimension_semantics<arbitrary>], iteration_bounds = array<i64: 1, 1>, scalar_prefetch = 0 : i64, scratch_operands = 1 : i64, tpu.core_type = #tpu.core_type<tc>, window_params = [{transform_indices = @transform_0, window_bounds = array<i64: 16, 32>}, {transform_indices = @transform_1, window_bounds = array<i64: 32, 32>}, {pipeline_mode = #tpu.pipeline_mode<synchronous>, transform_indices = @transform_2, window_bounds = array<i64: 1, 32>}, {transform_indices = @transform_3, window_bounds = array<i64: 16, 32>}, {pipeline_mode = #tpu.pipeline_mode<synchronous>, transform_indices = @transform_4, window_bounds = array<i64: 1, 32>}, {pipeline_mode = #tpu.pipeline_mode<synchronous>, transform_indices = @transform_5, window_bounds = array<i64: 1, 32>}, {transform_indices = @transform_6, window_bounds = array<i64: 16, 32>}]} {
    %c0_i32 = arith.constant 0 : i32
    %0 = arith.cmpi eq, %arg1, %c0_i32 : i32
    %1 = arith.extui %0 : i1 to i32
    %c0_i32_0 = arith.constant 0 : i32
    %2 = arith.cmpi ne, %1, %c0_i32_0 : i32
    scf.if %2 {
      %cst_10 = arith.constant 0.000000e+00 : f32
      %12 = vector.broadcast %cst_10 : f32 to vector<16x32xf32>
      %c0_11 = arith.constant 0 : index
      %c0_12 = arith.constant 0 : index
      %13 = vector.load %arg9[%c0_11, %c0_12] : memref<16x32xf32, #tpu.memory_space<vmem>>, vector<16x32xf32>
      tpu.vector_store %arg9[%c0_11, %c0_12], %12 {strides = array<i32>} : memref<16x32xf32, #tpu.memory_space<vmem>>, vector<16x32xf32>,
    } else {
    }
    %c0 = arith.constant 0 : index
    %c0_1 = arith.constant 0 : index
    %3 = vector.load %arg9[%c0, %c0_1] : memref<16x32xf32, #tpu.memory_space<vmem>>, vector<16x32xf32>
    %c0_2 = arith.constant 0 : index
    %c0_3 = arith.constant 0 : index
    %4 = vector.load %arg2[%c0_2, %c0_3] : memref<16x32xbf16, #tpu.memory_space<vmem>>, vector<16x32xbf16>
    %c0_4 = arith.constant 0 : index
    %c0_5 = arith.constant 0 : index
    %5 = vector.load %arg3[%c0_4, %c0_5] : memref<32x32xbf16, #tpu.memory_space<vmem>>, vector<32x32xbf16>
    %cst = arith.constant dense<0.000000e+00> : vector<16x32xf32>
    %6 = tpu.matmul %4, %5, %cst {dimension_numbers = #tpu.dot_dimension_numbers<[1], [0], [0], [1], [0, 0, 1, 1], [], []>} : vector<16x32xbf16>, vector<32x32xbf16>, vector<16x32xf32> -> vector<16x32xf32>
    %7 = arith.addf %3, %6 : vector<16x32xf32>
    %c0_6 = arith.constant 0 : index
    %c0_7 = arith.constant 0 : index
    %8 = vector.load %arg9[%c0_6, %c0_7] : memref<16x32xf32, #tpu.memory_space<vmem>>, vector<16x32xf32>
    tpu.vector_store %arg9[%c0_6, %c0_7], %7 {strides = array<i32>} : memref<16x32xf32, #tpu.memory_space<vmem>>, vector<16x32xf32>,
    %c0_i32_8 = arith.constant 0 : i32
    %9 = arith.cmpi eq, %arg1, %c0_i32_8 : i32
    %10 = arith.extui %9 : i1 to i32
    %c0_i32_9 = arith.constant 0 : i32
    %11 = arith.cmpi ne, %10, %c0_i32_9 : i32
    scf.if %11 {
      %c0_10 = arith.constant 0 : index
      %c0_11 = arith.constant 0 : index
      %12 = vector.load %arg9[%c0_10, %c0_11] : memref<16x32xf32, #tpu.memory_space<vmem>>, vector<16x32xf32>
      %c0_12 = arith.constant 0 : index
      %c0_13 = arith.constant 0 : index
      %13 = vector.load %arg4[%c0_12, %c0_13] : memref<1x32xf32, #tpu.memory_space<vmem>>, vector<1x32xf32>
      %14 = vector.broadcast %13 : vector<1x32xf32> to vector<16x32xf32>
      %15 = arith.addf %12, %14 : vector<16x32xf32>
      %c0_14 = arith.constant 0 : index
      %c0_15 = arith.constant 0 : index
      %16 = vector.load %arg5[%c0_14, %c0_15] : memref<16x32xbf16, #tpu.memory_space<vmem>>, vector<16x32xbf16>
      %17 = arith.extf %16 : vector<16x32xbf16> to vector<16x32xf32>
      %18 = arith.addf %15, %17 : vector<16x32xf32>
      %cst_16 = arith.constant dense<0.000000e+00> : vector<16xf32>
      %19 = vector.multi_reduction <add>, %18, %cst_16 [1] : vector<16x32xf32> to vector<16xf32>
      %20 = vector.shape_cast %19 : vector<16xf32> to vector<16x1xf32>
      %cst_17 = arith.constant 3.200000e+01 : f32
      %21 = vector.broadcast %cst_17 : f32 to vector<16x1xf32>
      %22 = arith.divf %20, %21 : vector<16x1xf32>
      %23 = vector.broadcast %22 : vector<16x1xf32> to vector<16x32xf32>
      %24 = arith.subf %18, %23 : vector<16x32xf32>
      %25 = arith.mulf %24, %24 : vector<16x32xf32>
      %cst_18 = arith.constant dense<0.000000e+00> : vector<16xf32>
      %26 = vector.multi_reduction <add>, %25, %cst_18 [1] : vector<16x32xf32> to vector<16xf32>
      %27 = vector.shape_cast %26 : vector<16xf32> to vector<16x1xf32>
      %cst_19 = arith.constant 3.200000e+01 : f32
      %28 = vector.broadcast %cst_19 : f32 to vector<16x1xf32>
      %29 = arith.divf %27, %28 : vector<16x1xf32>
      %30 = vector.broadcast %22 : vector<16x1xf32> to vector<16x32xf32>
      %31 = arith.subf %18, %30 : vector<16x32xf32>
      %cst_20 = arith.constant 9.99999974E-6 : f32
      %32 = vector.broadcast %cst_20 : f32 to vector<16x1xf32>
      %33 = arith.addf %29, %32 : vector<16x1xf32>
      %34 = math.rsqrt %33 : vector<16x1xf32>
      %35 = vector.broadcast %34 : vector<16x1xf32> to vector<16x32xf32>
      %36 = arith.mulf %31, %35 : vector<16x32xf32>
      %c0_21 = arith.constant 0 : index
      %c0_22 = arith.constant 0 : index
      %37 = vector.load %arg6[%c0_21, %c0_22] : memref<1x32xf32, #tpu.memory_space<vmem>>, vector<1x32xf32>
      %38 = vector.broadcast %37 : vector<1x32xf32> to vector<16x32xf32>
      %39 = arith.mulf %36, %38 : vector<16x32xf32>
      %c0_23 = arith.constant 0 : index
      %c0_24 = arith.constant 0 : index
      %40 = vector.load %arg7[%c0_23, %c0_24] : memref<1x32xf32, #tpu.memory_space<vmem>>, vector<1x32xf32>
      %41 = vector.broadcast %40 : vector<1x32xf32> to vector<16x32xf32>
      %42 = arith.addf %39, %41 : vector<16x32xf32>
      %43 = arith.truncf %42 : vector<16x32xf32> to vector<16x32xbf16>
      %c0_25 = arith.constant 0 : index
      %c0_26 = arith.constant 0 : index
      %44 = vector.load %arg8[%c0_25, %c0_26] : memref<16x32xbf16, #tpu.memory_space<vmem>>, vector<16x32xbf16>
      tpu.vector_store %arg8[%c0_25, %c0_26], %43 {strides = array<i32>} : memref<16x32xbf16, #tpu.memory_space<vmem>>, vector<16x32xbf16>,
    } else {
    }
    return
  }
  func.func @transform_0(%arg0: i32, %arg1: i32) -> (i32, i32) {
    %c0_i32 = arith.constant 0 : i32
    return %arg0, %arg1 : i32, i32
  }
  func.func @transform_1(%arg0: i32, %arg1: i32) -> (i32, i32) {
    %c0_i32 = arith.constant 0 : i32
    %c0_i32_0 = arith.constant 0 : i32
    return %arg1, %c0_i32 : i32, i32
  }
  func.func @transform_2(%arg0: i32, %arg1: i32) -> (i32, i32) {
    %c0_i32 = arith.constant 0 : i32
    %c0_i32_0 = arith.constant 0 : i32
    %c0_i32_1 = arith.constant 0 : i32
    return %c0_i32, %c0_i32_0 : i32, i32
  }
  func.func @transform_3(%arg0: i32, %arg1: i32) -> (i32, i32) {
    %c0_i32 = arith.constant 0 : i32
    %c0_i32_0 = arith.constant 0 : i32
    return %arg0, %c0_i32 : i32, i32
  }
  func.func @transform_4(%arg0: i32, %arg1: i32) -> (i32, i32) {
    %c0_i32 = arith.constant 0 : i32
    %c0_i32_0 = arith.constant 0 : i32
    %c0_i32_1 = arith.constant 0 : i32
    return %c0_i32, %c0_i32_0 : i32, i32
  }
  func.func @transform_5(%arg0: i32, %arg1: i32) -> (i32, i32) {
    %c0_i32 = arith.constant 0 : i32
    %c0_i32_0 = arith.constant 0 : i32
    %c0_i32_1 = arith.constant 0 : i32
    return %c0_i32, %c0_i32_0 : i32, i32
  }
  func.func @transform_6(%arg0: i32, %arg1: i32) -> (i32, i32) {
    %c0_i32 = arith.constant 0 : i32
    %c0_i32_0 = arith.constant 0 : i32
    return %arg0, %c0_i32 : i32, i32
  }
}

module attributes {stable_mosaic.version = 11 : i64} {
  func.func @_matmul_kernel(%arg0: i32, %arg1: i32, %arg2: i32, %arg3: memref<16x32xbf16, #tpu.memory_space<vmem>>, %arg4: memref<32x64xbf16, #tpu.memory_space<vmem>>, %arg5: memref<1x64xf32, #tpu.memory_space<vmem>>, %arg6: memref<16x64xbf16, #tpu.memory_space<vmem>>, %arg7: memref<16x64xf32, #tpu.memory_space<vmem>>) attributes {dimension_semantics = [#tpu.dimension_semantics<parallel>, #tpu.dimension_semantics<parallel>, #tpu.dimension_semantics<arbitrary>], iteration_bounds = array<i64: 1, 1, 1>, scalar_prefetch = 0 : i64, scratch_operands = 1 : i64, tpu.core_type = #tpu.core_type<tc>, window_params = [{transform_indices = @transform_0, window_bounds = array<i64: 16, 32>}, {transform_indices = @transform_1, window_bounds = array<i64: 32, 64>}, {transform_indices = @transform_2, window_bounds = array<i64: 1, 64>}, {transform_indices = @transform_3, window_bounds = array<i64: 16, 64>}]} {
    %c0_i32 = arith.constant 0 : i32
    %0 = arith.cmpi eq, %arg2, %c0_i32 : i32
    %1 = arith.extui %0 : i1 to i32
    %c0_i32_0 = arith.constant 0 : i32
    %2 = arith.cmpi ne, %1, %c0_i32_0 : i32
    scf.if %2 {
      %cst_10 = arith.constant 0.000000e+00 : f32
      %12 = vector.broadcast %cst_10 : f32 to vector<16x64xf32>
      %c0_11 = arith.constant 0 : index
      %c0_12 = arith.constant 0 : index
      %13 = vector.load %arg7[%c0_11, %c0_12] : memref<16x64xf32, #tpu.memory_space<vmem>>, vector<16x64xf32>
      tpu.vector_store %arg7[%c0_11, %c0_12], %12 {strides = array<i32>} : memref<16x64xf32, #tpu.memory_space<vmem>>, vector<16x64xf32>,
    } else {
    }
    %c0 = arith.constant 0 : index
    %c0_1 = arith.constant 0 : index
    %3 = vector.load %arg7[%c0, %c0_1] : memref<16x64xf32, #tpu.memory_space<vmem>>, vector<16x64xf32>
    %c0_2 = arith.constant 0 : index
    %c0_3 = arith.constant 0 : index
    %4 = vector.load %arg3[%c0_2, %c0_3] : memref<16x32xbf16, #tpu.memory_space<vmem>>, vector<16x32xbf16>
    %c0_4 = arith.constant 0 : index
    %c0_5 = arith.constant 0 : index
    %5 = vector.load %arg4[%c0_4, %c0_5] : memref<32x64xbf16, #tpu.memory_space<vmem>>, vector<32x64xbf16>
    %cst = arith.constant dense<0.000000e+00> : vector<16x64xf32>
    %6 = tpu.matmul %4, %5, %cst {dimension_numbers = #tpu.dot_dimension_numbers<[1], [0], [0], [1], [0, 0, 1, 1], [], []>} : vector<16x32xbf16>, vector<32x64xbf16>, vector<16x64xf32> -> vector<16x64xf32>
    %7 = arith.addf %3, %6 : vector<16x64xf32>
    %c0_6 = arith.constant 0 : index
    %c0_7 = arith.constant 0 : index
    %8 = vector.load %arg7[%c0_6, %c0_7] : memref<16x64xf32, #tpu.memory_space<vmem>>, vector<16x64xf32>
    tpu.vector_store %arg7[%c0_6, %c0_7], %7 {strides = array<i32>} : memref<16x64xf32, #tpu.memory_space<vmem>>, vector<16x64xf32>,
    %c0_i32_8 = arith.constant 0 : i32
    %9 = arith.cmpi eq, %arg2, %c0_i32_8 : i32
    %10 = arith.extui %9 : i1 to i32
    %c0_i32_9 = arith.constant 0 : i32
    %11 = arith.cmpi ne, %10, %c0_i32_9 : i32
    scf.if %11 {
      %c0_10 = arith.constant 0 : index
      %c0_11 = arith.constant 0 : index
      %12 = vector.load %arg7[%c0_10, %c0_11] : memref<16x64xf32, #tpu.memory_space<vmem>>, vector<16x64xf32>
      %c0_12 = arith.constant 0 : index
      %c0_13 = arith.constant 0 : index
      %13 = vector.load %arg5[%c0_12, %c0_13] : memref<1x64xf32, #tpu.memory_space<vmem>>, vector<1x64xf32>
      %14 = vector.broadcast %13 : vector<1x64xf32> to vector<16x64xf32>
      %15 = arith.addf %12, %14 : vector<16x64xf32>
      %cst_14 = arith.constant 5.000000e-01 : f32
      %16 = vector.broadcast %cst_14 : f32 to vector<16x64xf32>
      %17 = arith.mulf %16, %15 : vector<16x64xf32>
      %cst_15 = arith.constant 0.707106769 : f32
      %18 = vector.broadcast %cst_15 : f32 to vector<16x64xf32>
      %19 = arith.mulf %15, %18 : vector<16x64xf32>
      %20 = math.absf %19 : vector<16x64xf32>
      %cst_16 = arith.constant 0.327591091 : f32
      %21 = vector.broadcast %cst_16 : f32 to vector<16x64xf32>
      %22 = arith.mulf %21, %20 : vector<16x64xf32>
      %cst_17 = arith.constant 1.000000e+00 : f32
      %23 = vector.broadcast %cst_17 : f32 to vector<16x64xf32>
      %24 = arith.addf %23, %22 : vector<16x64xf32>
      %cst_18 = arith.constant 1.000000e+00 : f32
      %25 = vector.broadcast %cst_18 : f32 to vector<16x64xf32>
      %26 = arith.divf %25, %24 : vector<16x64xf32>
      %cst_19 = arith.constant 1.06140542 : f32
      %27 = vector.broadcast %cst_19 : f32 to vector<16x64xf32>
      %28 = arith.mulf %27, %26 : vector<16x64xf32>
      %cst_20 = arith.constant -1.45315206 : f32
      %29 = vector.broadcast %cst_20 : f32 to vector<16x64xf32>
      %30 = arith.addf %28, %29 : vector<16x64xf32>
      %31 = arith.mulf %30, %26 : vector<16x64xf32>
      %cst_21 = arith.constant 1.42141378 : f32
      %32 = vector.broadcast %cst_21 : f32 to vector<16x64xf32>
      %33 = arith.addf %31, %32 : vector<16x64xf32>
      %34 = arith.mulf %33, %26 : vector<16x64xf32>
      %cst_22 = arith.constant -0.284496725 : f32
      %35 = vector.broadcast %cst_22 : f32 to vector<16x64xf32>
      %36 = arith.addf %34, %35 : vector<16x64xf32>
      %37 = arith.mulf %36, %26 : vector<16x64xf32>
      %cst_23 = arith.constant 0.254829586 : f32
      %38 = vector.broadcast %cst_23 : f32 to vector<16x64xf32>
      %39 = arith.addf %37, %38 : vector<16x64xf32>
      %40 = arith.mulf %39, %26 : vector<16x64xf32>
      %cst_24 = arith.constant 0.000000e+00 : f32
      %41 = vector.broadcast %cst_24 : f32 to vector<16x64xf32>
      %42 = arith.subf %41, %20 : vector<16x64xf32>
      %43 = arith.mulf %42, %20 : vector<16x64xf32>
      %44 = math.exp %43 : vector<16x64xf32>
      %45 = arith.mulf %40, %44 : vector<16x64xf32>
      %cst_25 = arith.constant 1.000000e+00 : f32
      %46 = vector.broadcast %cst_25 : f32 to vector<16x64xf32>
      %47 = arith.subf %46, %45 : vector<16x64xf32>
      %cst_26 = arith.constant 0.000000e+00 : f32
      %48 = vector.broadcast %cst_26 : f32 to vector<16x64xf32>
      %49 = arith.cmpf oge, %19, %48 : vector<16x64xf32>
      %cst_27 = arith.constant 0.000000e+00 : f32
      %50 = vector.broadcast %cst_27 : f32 to vector<16x64xf32>
      %51 = arith.subf %50, %47 : vector<16x64xf32>
      %52 = arith.select %49, %47, %51 : vector<16x64xi1>, vector<16x64xf32>
      %cst_28 = arith.constant 1.000000e+00 : f32
      %53 = vector.broadcast %cst_28 : f32 to vector<16x64xf32>
      %54 = arith.addf %53, %52 : vector<16x64xf32>
      %55 = arith.mulf %17, %54 : vector<16x64xf32>
      %56 = arith.truncf %55 : vector<16x64xf32> to vector<16x64xbf16>
      %c0_29 = arith.constant 0 : index
      %c0_30 = arith.constant 0 : index
      %57 = vector.load %arg6[%c0_29, %c0_30] : memref<16x64xbf16, #tpu.memory_space<vmem>>, vector<16x64xbf16>
      tpu.vector_store %arg6[%c0_29, %c0_30], %56 {strides = array<i32>} : memref<16x64xbf16, #tpu.memory_space<vmem>>, vector<16x64xbf16>,
    } else {
    }
    return
  }
  func.func @transform_0(%arg0: i32, %arg1: i32, %arg2: i32) -> (i32, i32) {
    %c0_i32 = arith.constant 0 : i32
    return %arg0, %arg2 : i32, i32
  }
  func.func @transform_1(%arg0: i32, %arg1: i32, %arg2: i32) -> (i32, i32) {
    %c0_i32 = arith.constant 0 : i32
    return %arg2, %arg1 : i32, i32
  }
  func.func @transform_2(%arg0: i32, %arg1: i32, %arg2: i32) -> (i32, i32) {
    %c0_i32 = arith.constant 0 : i32
    %c0_i32_0 = arith.constant 0 : i32
    return %c0_i32, %arg1 : i32, i32
  }
  func.func @transform_3(%arg0: i32, %arg1: i32, %arg2: i32) -> (i32, i32) {
    %c0_i32 = arith.constant 0 : i32
    return %arg0, %arg1 : i32, i32
  }
}

module attributes {stable_mosaic.version = 11 : i64} {
  func.func @_ln_kernel(%arg0: i32, %arg1: memref<16x32xbf16, #tpu.memory_space<vmem>>, %arg2: memref<1x32xf32, #tpu.memory_space<vmem>>, %arg3: memref<1x32xf32, #tpu.memory_space<vmem>>, %arg4: memref<16x32xbf16, #tpu.memory_space<vmem>>) attributes {dimension_semantics = [#tpu.dimension_semantics<parallel>], iteration_bounds = array<i64: 1>, scalar_prefetch = 0 : i64, scratch_operands = 0 : i64, tpu.core_type = #tpu.core_type<tc>, window_params = [{transform_indices = @transform_0, window_bounds = array<i64: 16, 32>}, {pipeline_mode = #tpu.pipeline_mode<synchronous>, transform_indices = @transform_1, window_bounds = array<i64: 1, 32>}, {pipeline_mode = #tpu.pipeline_mode<synchronous>, transform_indices = @transform_2, window_bounds = array<i64: 1, 32>}, {transform_indices = @transform_3, window_bounds = array<i64: 16, 32>}]} {
    %c0 = arith.constant 0 : index
    %c0_0 = arith.constant 0 : index
    %0 = vector.load %arg1[%c0, %c0_0] : memref<16x32xbf16, #tpu.memory_space<vmem>>, vector<16x32xbf16>
    %1 = arith.extf %0 : vector<16x32xbf16> to vector<16x32xf32>
    %cst = arith.constant dense<0.000000e+00> : vector<16xf32>
    %2 = vector.multi_reduction <add>, %1, %cst [1] : vector<16x32xf32> to vector<16xf32>
    %3 = vector.shape_cast %2 : vector<16xf32> to vector<16x1xf32>
    %cst_1 = arith.constant 3.200000e+01 : f32
    %4 = vector.broadcast %cst_1 : f32 to vector<16x1xf32>
    %5 = arith.divf %3, %4 : vector<16x1xf32>
    %6 = vector.broadcast %5 : vector<16x1xf32> to vector<16x32xf32>
    %7 = arith.subf %1, %6 : vector<16x32xf32>
    %8 = arith.mulf %7, %7 : vector<16x32xf32>
    %cst_2 = arith.constant dense<0.000000e+00> : vector<16xf32>
    %9 = vector.multi_reduction <add>, %8, %cst_2 [1] : vector<16x32xf32> to vector<16xf32>
    %10 = vector.shape_cast %9 : vector<16xf32> to vector<16x1xf32>
    %cst_3 = arith.constant 3.200000e+01 : f32
    %11 = vector.broadcast %cst_3 : f32 to vector<16x1xf32>
    %12 = arith.divf %10, %11 : vector<16x1xf32>
    %13 = vector.broadcast %5 : vector<16x1xf32> to vector<16x32xf32>
    %14 = arith.subf %1, %13 : vector<16x32xf32>
    %cst_4 = arith.constant 9.99999974E-6 : f32
    %15 = vector.broadcast %cst_4 : f32 to vector<16x1xf32>
    %16 = arith.addf %12, %15 : vector<16x1xf32>
    %17 = math.rsqrt %16 : vector<16x1xf32>
    %18 = vector.broadcast %17 : vector<16x1xf32> to vector<16x32xf32>
    %19 = arith.mulf %14, %18 : vector<16x32xf32>
    %c0_5 = arith.constant 0 : index
    %c0_6 = arith.constant 0 : index
    %20 = vector.load %arg2[%c0_5, %c0_6] : memref<1x32xf32, #tpu.memory_space<vmem>>, vector<1x32xf32>
    %21 = vector.broadcast %20 : vector<1x32xf32> to vector<16x32xf32>
    %22 = arith.mulf %19, %21 : vector<16x32xf32>
    %c0_7 = arith.constant 0 : index
    %c0_8 = arith.constant 0 : index
    %23 = vector.load %arg3[%c0_7, %c0_8] : memref<1x32xf32, #tpu.memory_space<vmem>>, vector<1x32xf32>
    %24 = vector.broadcast %23 : vector<1x32xf32> to vector<16x32xf32>
    %25 = arith.addf %22, %24 : vector<16x32xf32>
    %26 = arith.truncf %25 : vector<16x32xf32> to vector<16x32xbf16>
    %c0_9 = arith.constant 0 : index
    %c0_10 = arith.constant 0 : index
    %27 = vector.load %arg4[%c0_9, %c0_10] : memref<16x32xbf16, #tpu.memory_space<vmem>>, vector<16x32xbf16>
    tpu.vector_store %arg4[%c0_9, %c0_10], %26 {strides = array<i32>} : memref<16x32xbf16, #tpu.memory_space<vmem>>, vector<16x32xbf16>,
    return
  }
  func.func @transform_0(%arg0: i32) -> (i32, i32) {
    %c0_i32 = arith.constant 0 : i32
    %c0_i32_0 = arith.constant 0 : i32
    return %arg0, %c0_i32 : i32, i32
  }
  func.func @transform_1(%arg0: i32) -> (i32, i32) {
    %c0_i32 = arith.constant 0 : i32
    %c0_i32_0 = arith.constant 0 : i32
    %c0_i32_1 = arith.constant 0 : i32
    return %c0_i32, %c0_i32_0 : i32, i32
  }
  func.func @transform_2(%arg0: i32) -> (i32, i32) {
    %c0_i32 = arith.constant 0 : i32
    %c0_i32_0 = arith.constant 0 : i32
    %c0_i32_1 = arith.constant 0 : i32
    return %c0_i32, %c0_i32_0 : i32, i32
  }
  func.func @transform_3(%arg0: i32) -> (i32, i32) {
    %c0_i32 = arith.constant 0 : i32
    %c0_i32_0 = arith.constant 0 : i32
    return %arg0, %c0_i32 : i32, i32
  }
}

module attributes {stable_mosaic.version = 11 : i64} {
  func.func @_matmul_res_ln_kernel(%arg0: i32, %arg1: i32, %arg2: memref<16x64xbf16, #tpu.memory_space<vmem>>, %arg3: memref<64x32xbf16, #tpu.memory_space<vmem>>, %arg4: memref<1x32xf32, #tpu.memory_space<vmem>>, %arg5: memref<16x32xbf16, #tpu.memory_space<vmem>>, %arg6: memref<1x32xf32, #tpu.memory_space<vmem>>, %arg7: memref<1x32xf32, #tpu.memory_space<vmem>>, %arg8: memref<16x32xbf16, #tpu.memory_space<vmem>>, %arg9: memref<16x32xf32, #tpu.memory_space<vmem>>) attributes {dimension_semantics = [#tpu.dimension_semantics<parallel>, #tpu.dimension_semantics<arbitrary>], iteration_bounds = array<i64: 1, 1>, scalar_prefetch = 0 : i64, scratch_operands = 1 : i64, tpu.core_type = #tpu.core_type<tc>, window_params = [{transform_indices = @transform_0, window_bounds = array<i64: 16, 64>}, {transform_indices = @transform_1, window_bounds = array<i64: 64, 32>}, {pipeline_mode = #tpu.pipeline_mode<synchronous>, transform_indices = @transform_2, window_bounds = array<i64: 1, 32>}, {transform_indices = @transform_3, window_bounds = array<i64: 16, 32>}, {pipeline_mode = #tpu.pipeline_mode<synchronous>, transform_indices = @transform_4, window_bounds = array<i64: 1, 32>}, {pipeline_mode = #tpu.pipeline_mode<synchronous>, transform_indices = @transform_5, window_bounds = array<i64: 1, 32>}, {transform_indices = @transform_6, window_bounds = array<i64: 16, 32>}]} {
    %c0_i32 = arith.constant 0 : i32
    %0 = arith.cmpi eq, %arg1, %c0_i32 : i32
    %1 = arith.extui %0 : i1 to i32
    %c0_i32_0 = arith.constant 0 : i32
    %2 = arith.cmpi ne, %1, %c0_i32_0 : i32
    scf.if %2 {
      %cst_10 = arith.constant 0.000000e+00 : f32
      %12 = vector.broadcast %cst_10 : f32 to vector<16x32xf32>
      %c0_11 = arith.constant 0 : index
      %c0_12 = arith.constant 0 : index
      %13 = vector.load %arg9[%c0_11, %c0_12] : memref<16x32xf32, #tpu.memory_space<vmem>>, vector<16x32xf32>
      tpu.vector_store %arg9[%c0_11, %c0_12], %12 {strides = array<i32>} : memref<16x32xf32, #tpu.memory_space<vmem>>, vector<16x32xf32>,
    } else {
    }
    %c0 = arith.constant 0 : index
    %c0_1 = arith.constant 0 : index
    %3 = vector.load %arg9[%c0, %c0_1] : memref<16x32xf32, #tpu.memory_space<vmem>>, vector<16x32xf32>
    %c0_2 = arith.constant 0 : index
    %c0_3 = arith.constant 0 : index
    %4 = vector.load %arg2[%c0_2, %c0_3] : memref<16x64xbf16, #tpu.memory_space<vmem>>, vector<16x64xbf16>
    %c0_4 = arith.constant 0 : index
    %c0_5 = arith.constant 0 : index
    %5 = vector.load %arg3[%c0_4, %c0_5] : memref<64x32xbf16, #tpu.memory_space<vmem>>, vector<64x32xbf16>
    %cst = arith.constant dense<0.000000e+00> : vector<16x32xf32>
    %6 = tpu.matmul %4, %5, %cst {dimension_numbers = #tpu.dot_dimension_numbers<[1], [0], [0], [1], [0, 0, 1, 1], [], []>} : vector<16x64xbf16>, vector<64x32xbf16>, vector<16x32xf32> -> vector<16x32xf32>
    %7 = arith.addf %3, %6 : vector<16x32xf32>
    %c0_6 = arith.constant 0 : index
    %c0_7 = arith.constant 0 : index
    %8 = vector.load %arg9[%c0_6, %c0_7] : memref<16x32xf32, #tpu.memory_space<vmem>>, vector<16x32xf32>
    tpu.vector_store %arg9[%c0_6, %c0_7], %7 {strides = array<i32>} : memref<16x32xf32, #tpu.memory_space<vmem>>, vector<16x32xf32>,
    %c0_i32_8 = arith.constant 0 : i32
    %9 = arith.cmpi eq, %arg1, %c0_i32_8 : i32
    %10 = arith.extui %9 : i1 to i32
    %c0_i32_9 = arith.constant 0 : i32
    %11 = arith.cmpi ne, %10, %c0_i32_9 : i32
    scf.if %11 {
      %c0_10 = arith.constant 0 : index
      %c0_11 = arith.constant 0 : index
      %12 = vector.load %arg9[%c0_10, %c0_11] : memref<16x32xf32, #tpu.memory_space<vmem>>, vector<16x32xf32>
      %c0_12 = arith.constant 0 : index
      %c0_13 = arith.constant 0 : index
      %13 = vector.load %arg4[%c0_12, %c0_13] : memref<1x32xf32, #tpu.memory_space<vmem>>, vector<1x32xf32>
      %14 = vector.broadcast %13 : vector<1x32xf32> to vector<16x32xf32>
      %15 = arith.addf %12, %14 : vector<16x32xf32>
      %c0_14 = arith.constant 0 : index
      %c0_15 = arith.constant 0 : index
      %16 = vector.load %arg5[%c0_14, %c0_15] : memref<16x32xbf16, #tpu.memory_space<vmem>>, vector<16x32xbf16>
      %17 = arith.extf %16 : vector<16x32xbf16> to vector<16x32xf32>
      %18 = arith.addf %15, %17 : vector<16x32xf32>
      %cst_16 = arith.constant dense<0.000000e+00> : vector<16xf32>
      %19 = vector.multi_reduction <add>, %18, %cst_16 [1] : vector<16x32xf32> to vector<16xf32>
      %20 = vector.shape_cast %19 : vector<16xf32> to vector<16x1xf32>
      %cst_17 = arith.constant 3.200000e+01 : f32
      %21 = vector.broadcast %cst_17 : f32 to vector<16x1xf32>
      %22 = arith.divf %20, %21 : vector<16x1xf32>
      %23 = vector.broadcast %22 : vector<16x1xf32> to vector<16x32xf32>
      %24 = arith.subf %18, %23 : vector<16x32xf32>
      %25 = arith.mulf %24, %24 : vector<16x32xf32>
      %cst_18 = arith.constant dense<0.000000e+00> : vector<16xf32>
      %26 = vector.multi_reduction <add>, %25, %cst_18 [1] : vector<16x32xf32> to vector<16xf32>
      %27 = vector.shape_cast %26 : vector<16xf32> to vector<16x1xf32>
      %cst_19 = arith.constant 3.200000e+01 : f32
      %28 = vector.broadcast %cst_19 : f32 to vector<16x1xf32>
      %29 = arith.divf %27, %28 : vector<16x1xf32>
      %30 = vector.broadcast %22 : vector<16x1xf32> to vector<16x32xf32>
      %31 = arith.subf %18, %30 : vector<16x32xf32>
      %cst_20 = arith.constant 9.99999974E-6 : f32
      %32 = vector.broadcast %cst_20 : f32 to vector<16x1xf32>
      %33 = arith.addf %29, %32 : vector<16x1xf32>
      %34 = math.rsqrt %33 : vector<16x1xf32>
      %35 = vector.broadcast %34 : vector<16x1xf32> to vector<16x32xf32>
      %36 = arith.mulf %31, %35 : vector<16x32xf32>
      %c0_21 = arith.constant 0 : index
      %c0_22 = arith.constant 0 : index
      %37 = vector.load %arg6[%c0_21, %c0_22] : memref<1x32xf32, #tpu.memory_space<vmem>>, vector<1x32xf32>
      %38 = vector.broadcast %37 : vector<1x32xf32> to vector<16x32xf32>
      %39 = arith.mulf %36, %38 : vector<16x32xf32>
      %c0_23 = arith.constant 0 : index
      %c0_24 = arith.constant 0 : index
      %40 = vector.load %arg7[%c0_23, %c0_24] : memref<1x32xf32, #tpu.memory_space<vmem>>, vector<1x32xf32>
      %41 = vector.broadcast %40 : vector<1x32xf32> to vector<16x32xf32>
      %42 = arith.addf %39, %41 : vector<16x32xf32>
      %43 = arith.truncf %42 : vector<16x32xf32> to vector<16x32xbf16>
      %c0_25 = arith.constant 0 : index
      %c0_26 = arith.constant 0 : index
      %44 = vector.load %arg8[%c0_25, %c0_26] : memref<16x32xbf16, #tpu.memory_space<vmem>>, vector<16x32xbf16>
      tpu.vector_store %arg8[%c0_25, %c0_26], %43 {strides = array<i32>} : memref<16x32xbf16, #tpu.memory_space<vmem>>, vector<16x32xbf16>,
    } else {
    }
    return
  }
  func.func @transform_0(%arg0: i32, %arg1: i32) -> (i32, i32) {
    %c0_i32 = arith.constant 0 : i32
    return %arg0, %arg1 : i32, i32
  }
  func.func @transform_1(%arg0: i32, %arg1: i32) -> (i32, i32) {
    %c0_i32 = arith.constant 0 : i32
    %c0_i32_0 = arith.constant 0 : i32
    return %arg1, %c0_i32 : i32, i32
  }
  func.func @transform_2(%arg0: i32, %arg1: i32) -> (i32, i32) {
    %c0_i32 = arith.constant 0 : i32
    %c0_i32_0 = arith.constant 0 : i32
    %c0_i32_1 = arith.constant 0 : i32
    return %c0_i32, %c0_i32_0 : i32, i32
  }
  func.func @transform_3(%arg0: i32, %arg1: i32) -> (i32, i32) {
    %c0_i32 = arith.constant 0 : i32
    %c0_i32_0 = arith.constant 0 : i32
    return %arg0, %c0_i32 : i32, i32
  }
  func.func @transform_4(%arg0: i32, %arg1: i32) -> (i32, i32) {
    %c0_i32 = arith.constant 0 : i32
    %c0_i32_0 = arith.constant 0 : i32
    %c0_i32_1 = arith.constant 0 : i32
    return %c0_i32, %c0_i32_0 : i32, i32
  }
  func.func @transform_5(%arg0: i32, %arg1: i32) -> (i32, i32) {
    %c0_i32 = arith.constant 0 : i32
    %c0_i32_0 = arith.constant 0 : i32
    %c0_i32_1 = arith.constant 0 : i32
    return %c0_i32, %c0_i32_0 : i32, i32
  }
  func.func @transform_6(%arg0: i32, %arg1: i32) -> (i32, i32) {
    %c0_i32 = arith.constant 0 : i32
    %c0_i32_0 = arith.constant 0 : i32
    return %arg0, %c0_i32 : i32, i32
  }
}

module attributes {stable_mosaic.version = 11 : i64} {
  func.func @_matmul_kernel(%arg0: i32, %arg1: i32, %arg2: i32, %arg3: memref<16x32xbf16, #tpu.memory_space<vmem>>, %arg4: memref<32x128xbf16, #tpu.memory_space<vmem>>, %arg5: memref<1x128xf32, #tpu.memory_space<vmem>>, %arg6: memref<16x128xf32, #tpu.memory_space<vmem>>, %arg7: memref<16x128xf32, #tpu.memory_space<vmem>>) attributes {dimension_semantics = [#tpu.dimension_semantics<parallel>, #tpu.dimension_semantics<parallel>, #tpu.dimension_semantics<arbitrary>], iteration_bounds = array<i64: 1, 1, 1>, scalar_prefetch = 0 : i64, scratch_operands = 1 : i64, tpu.core_type = #tpu.core_type<tc>, window_params = [{transform_indices = @transform_0, window_bounds = array<i64: 16, 32>}, {transform_indices = @transform_1, window_bounds = array<i64: 32, 128>}, {transform_indices = @transform_2, window_bounds = array<i64: 1, 128>}, {transform_indices = @transform_3, window_bounds = array<i64: 16, 128>}]} {
    %c0_i32 = arith.constant 0 : i32
    %0 = arith.cmpi eq, %arg2, %c0_i32 : i32
    %1 = arith.extui %0 : i1 to i32
    %c0_i32_0 = arith.constant 0 : i32
    %2 = arith.cmpi ne, %1, %c0_i32_0 : i32
    scf.if %2 {
      %cst_10 = arith.constant 0.000000e+00 : f32
      %12 = vector.broadcast %cst_10 : f32 to vector<16x128xf32>
      %c0_11 = arith.constant 0 : index
      %c0_12 = arith.constant 0 : index
      %13 = vector.load %arg7[%c0_11, %c0_12] : memref<16x128xf32, #tpu.memory_space<vmem>>, vector<16x128xf32>
      tpu.vector_store %arg7[%c0_11, %c0_12], %12 {strides = array<i32>} : memref<16x128xf32, #tpu.memory_space<vmem>>, vector<16x128xf32>,
    } else {
    }
    %c0 = arith.constant 0 : index
    %c0_1 = arith.constant 0 : index
    %3 = vector.load %arg7[%c0, %c0_1] : memref<16x128xf32, #tpu.memory_space<vmem>>, vector<16x128xf32>
    %c0_2 = arith.constant 0 : index
    %c0_3 = arith.constant 0 : index
    %4 = vector.load %arg3[%c0_2, %c0_3] : memref<16x32xbf16, #tpu.memory_space<vmem>>, vector<16x32xbf16>
    %c0_4 = arith.constant 0 : index
    %c0_5 = arith.constant 0 : index
    %5 = vector.load %arg4[%c0_4, %c0_5] : memref<32x128xbf16, #tpu.memory_space<vmem>>, vector<32x128xbf16>
    %cst = arith.constant dense<0.000000e+00> : vector<16x128xf32>
    %6 = tpu.matmul %4, %5, %cst {dimension_numbers = #tpu.dot_dimension_numbers<[1], [0], [0], [1], [0, 0, 1, 1], [], []>} : vector<16x32xbf16>, vector<32x128xbf16>, vector<16x128xf32> -> vector<16x128xf32>
    %7 = arith.addf %3, %6 : vector<16x128xf32>
    %c0_6 = arith.constant 0 : index
    %c0_7 = arith.constant 0 : index
    %8 = vector.load %arg7[%c0_6, %c0_7] : memref<16x128xf32, #tpu.memory_space<vmem>>, vector<16x128xf32>
    tpu.vector_store %arg7[%c0_6, %c0_7], %7 {strides = array<i32>} : memref<16x128xf32, #tpu.memory_space<vmem>>, vector<16x128xf32>,
    %c0_i32_8 = arith.constant 0 : i32
    %9 = arith.cmpi eq, %arg2, %c0_i32_8 : i32
    %10 = arith.extui %9 : i1 to i32
    %c0_i32_9 = arith.constant 0 : i32
    %11 = arith.cmpi ne, %10, %c0_i32_9 : i32
    scf.if %11 {
      %c0_10 = arith.constant 0 : index
      %c0_11 = arith.constant 0 : index
      %12 = vector.load %arg7[%c0_10, %c0_11] : memref<16x128xf32, #tpu.memory_space<vmem>>, vector<16x128xf32>
      %c0_12 = arith.constant 0 : index
      %c0_13 = arith.constant 0 : index
      %13 = vector.load %arg5[%c0_12, %c0_13] : memref<1x128xf32, #tpu.memory_space<vmem>>, vector<1x128xf32>
      %14 = vector.broadcast %13 : vector<1x128xf32> to vector<16x128xf32>
      %15 = arith.addf %12, %14 : vector<16x128xf32>
      %c0_14 = arith.constant 0 : index
      %c0_15 = arith.constant 0 : index
      %16 = vector.load %arg6[%c0_14, %c0_15] : memref<16x128xf32, #tpu.memory_space<vmem>>, vector<16x128xf32>
      tpu.vector_store %arg6[%c0_14, %c0_15], %15 {strides = array<i32>} : memref<16x128xf32, #tpu.memory_space<vmem>>, vector<16x128xf32>,
    } else {
    }
    return
  }
  func.func @transform_0(%arg0: i32, %arg1: i32, %arg2: i32) -> (i32, i32) {
    %c0_i32 = arith.constant 0 : i32
    return %arg0, %arg2 : i32, i32
  }
  func.func @transform_1(%arg0: i32, %arg1: i32, %arg2: i32) -> (i32, i32) {
    %c0_i32 = arith.constant 0 : i32
    return %arg2, %arg1 : i32, i32
  }
  func.func @transform_2(%arg0: i32, %arg1: i32, %arg2: i32) -> (i32, i32) {
    %c0_i32 = arith.constant 0 : i32
    %c0_i32_0 = arith.constant 0 : i32
    return %c0_i32, %arg1 : i32, i32
  }
  func.func @transform_3(%arg0: i32, %arg1: i32, %arg2: i32) -> (i32, i32) {
    %c0_i32 = arith.constant 0 : i32
    return %arg0, %arg1 : i32, i32
  }
}

</mosaic_0001>

<llo_original>
// kernel: bert_timeseries_forward.12
$region0: #{bert_timeseries_forward.12}
  #allocation0 [shape = 'u32[]', space=smem, size = 0x4, offset = 0x4, fixed_abs, tag = 'smem constant byte address 0x4 - core index']
  #allocation1 [shape = 'u32[144,128]{1,0:T(1,128)}', space=vmem, size = 0x12000, scoped, tag = 'internal scratch']
  #allocation2 [shape = 'f32[16,96]{1,0:T(8,128)}', space=vmem, size = 0x2000, scoped, tag = 'scratch operand']
  %s0 = inlined_call_operand.vmem [shape: bf16[16,32], index: 0, kind: input, shape index: {}]
  %s1 = inlined_call_operand.vmem [shape: bf16[32,96], index: 1, kind: input, shape index: {}]
  %s2 = inlined_call_operand.vmem [shape: f32[1,96], index: 2, kind: input, shape index: {}]
  %s3 = inlined_call_operand.vmem [shape: bf16[16,96], index: 3, kind: output, shape index: {}]
  %s4 = sld [smem:[#allocation0]]
  $region30: #{bert_timeseries_forward.12} parent=0
    _
  %s6 = ssub.s32 1, %s4
  %s7 = scalar_select 0, %s6, %s4
  // Predicated region
  $region2: #{bert_timeseries_forward.12} parent=0 // pred_check
    _
  $region3: #{bert_timeseries_forward.12} parent=0 // pred_check_branch
    %9 = sbr.rel (0) target = $region5
  $region4: #{bert_timeseries_forward.12} parent=0 // pred_region
    _
  $region5: #{bert_timeseries_forward.12} parent=0 // pred_fallthru
    _
  // Predicated region
  $region6: #{bert_timeseries_forward.12} parent=0 // pred_check
    _
  $region7: #{bert_timeseries_forward.12} parent=0 // pred_check_branch
    %11 = sbr.rel (0) target = $region9
  $region8: #{bert_timeseries_forward.12} parent=0 // pred_region
    _
  $region9: #{bert_timeseries_forward.12} parent=0 // pred_fallthru
    _
  // Predicated region
  $region10: #{bert_timeseries_forward.12} parent=0 // pred_check
    _
  $region11: #{bert_timeseries_forward.12} parent=0 // pred_check_branch
    %13 = sbr.rel (0) target = $region13
  $region12: #{bert_timeseries_forward.12} parent=0 // pred_region
    _
  $region13: #{bert_timeseries_forward.12} parent=0 // pred_fallthru
    _
  %p15 = scmp.eq.s32.totalorder 0, 0
  // Predicated region
  $region14: #{bert_timeseries_forward.12} parent=0 // pred_check
    %p16 = pneg %p15
  $region15: #{bert_timeseries_forward.12} parent=0 // pred_check_branch
    %18 = sbr.rel (%p16) target = $region17
  $region16: #{bert_timeseries_forward.12} parent=0 // pred_region
    %vm19 = vcmask 785408
    %20 = vst.msk [vmem:[#allocation2] sm:$0xff] %vm19, 0.0
    %21 = vst.msk [vmem:[#allocation2 + $0x8] sm:$0xff] %vm19, 0.0
  $region17: #{bert_timeseries_forward.12} parent=0 // pred_fallthru
    _
  %v22 = vld [vmem:[#allocation2] sm:$0xff]
  %v23 = vld [vmem:[#allocation2 + $0x8] sm:$0xff]
  %v24 = vld [vmem:[%s0] sm:$0xf]
  %v25 = vld [vmem:[%s0 + $0x4] sm:$0xf]
  %v26 = vld [vmem:[%s1] sm:$0xf]
  %v27 = vld [vmem:[%s1 + $0x4] sm:$0xf]
  %v28 = vld [vmem:[%s1 + $0x8] sm:$0xf]
  %v29 = vld [vmem:[%s1 + $0xc] sm:$0xf]
  %v32 = vunpack.c.l.b16 %v24
  %v33 = vunpack.c.l.b16 %v25
  %v34 = vpack.c.b16 %v33, %v32
  %v39 = vunpack.c.l.b16 %v26
  %v40 = vunpack.c.l.b16 %v27
  %v41 = vunpack.c.l.b16 %v28
  %v42 = vunpack.c.l.b16 %v29
  %v43 = vpack.c.b16 %v40, %v39
  %v44 = vpack.c.b16 %v42, %v41
  %vm47 = vcmask 261120
  %v49 = vsel %vm47, %v34, 0
  %51 = vmatprep.subr.bf16.mxu0 0
  %52 = vmatpush1.bf16.msra.mxu0 %v43
  %53 = vmatprep.subr.bf16.mxu0 0
  %54 = vmatpush1.bf16.msra.mxu0 %v44
  %55 = vmatprep.subr.bf16.mxu0 0
  %56 = vmatpush1.bf16.msra.mxu0 0
  %57 = vmatprep.subr.bf16.mxu0 0
  %58 = vmatpush1.bf16.msra.mxu0 0
  %59 = vmatprep.subr.bf16.mxu0 0
  %60 = vmatpush1.bf16.msra.mxu0 0
  %61 = vmatprep.subr.bf16.mxu0 0
  %62 = vmatpush1.bf16.msra.mxu0 0
  %63 = vmatprep.subr.bf16.mxu0 0
  %64 = vmatpush1.bf16.msra.mxu0 0
  %65 = vmatprep.subr.bf16.mxu0 0
  %66 = vmatpush1.bf16.msra.mxu0 0
  %67 = vmatprep.subr.bf16.mxu0 0
  %68 = vmatpush1.bf16.msra.mxu0 0
  %69 = vmatprep.subr.bf16.mxu0 0
  %70 = vmatpush1.bf16.msra.mxu0 0
  %71 = vmatprep.subr.bf16.mxu0 0
  %72 = vmatpush1.bf16.msra.mxu0 0
  %73 = vmatprep.subr.bf16.mxu0 0
  %74 = vmatpush1.bf16.msra.mxu0 0
  %75 = vmatprep.subr.bf16.mxu0 0
  %76 = vmatpush1.bf16.msra.mxu0 0
  %77 = vmatprep.subr.bf16.mxu0 0
  %78 = vmatpush1.bf16.msra.mxu0 0
  %79 = vmatprep.subr.bf16.mxu0 0
  %80 = vmatpush1.bf16.msra.mxu0 0
  %81 = vmatprep.subr.bf16.mxu0 0
  %82 = vmatpush1.bf16.msra.mxu0 0
  %83 = vmatprep.mubr.bf16.mxu0 0
  %84 = vmatmul.mubr.bf16.gmra.mrb[0].mxu0 %v49
  %v85 = vpop.f32.mrb[0].mxu0
  %v86 = vadd.f32 0.0, %v85
  %v87 = vpop.f32.mrb[0].mxu0
  %v88 = vpop.f32.mrb[0].mxu0
  %v89 = vadd.f32 0.0, %v88
  %v90 = vpop.f32.mrb[0].mxu0
  %91 = vdwg.mxu0
  %v92 = vadd.f32 %v22, %v86
  %v93 = vadd.f32 %v23, %v89
  %vm94 = vcmask 785408
  %95 = vst.msk [vmem:[#allocation2] sm:$0xff] %vm94, %v92
  %96 = vst.msk [vmem:[#allocation2 + $0x8] sm:$0xff] %vm94, %v93
  // Predicated region
  $region18: #{bert_timeseries_forward.12} parent=0 // pred_check
    %p97 = pneg %p15
  $region19: #{bert_timeseries_forward.12} parent=0 // pred_check_branch
    %99 = sbr.rel (%p97) target = $region21
  $region20: #{bert_timeseries_forward.12} parent=0 // pred_region
    %v100 = vld [vmem:[#allocation2] sm:$0xff]
    %v101 = vld [vmem:[#allocation2 + $0x8] sm:$0xff]
    %v102 = vld [vmem:[%s2] sm:$0x1]
    %v104 = vlaneseq
    %v105 = vshrl.u32 %v104, 7
    %v106 = vsub.s32 0, %v105
    %v107 = vrot.slane %v102, %v106
    %v109 = vadd.f32 %v100, %v107
    %v110 = vadd.f32 %v101, %v107
    %v111 = vpack.c.bf16 %v110, %v109
    %v113 = vunpack.c.l.b16 %v111
    %v114 = vunpack.c.h.b16 %v111
    %v115 = vpack.c.b16 %v113, %v113
    %v116 = vpack.c.b16 %v114, %v114
    %vm119 = vcmask 781312
    %120 = vst.msk [vmem:[%s3] sm:$0xf] %vm119, %v115
    %121 = vst.msk [vmem:[%s3 + $0x4] sm:$0xf] %vm119, %v116
  $region21: #{bert_timeseries_forward.12} parent=0 // pred_fallthru
    _
  // Predicated region
  $region22: #{bert_timeseries_forward.12} parent=0 // pred_check
    _
  $region23: #{bert_timeseries_forward.12} parent=0 // pred_check_branch
    %123 = sbr.rel (0) target = $region25
  $region24: #{bert_timeseries_forward.12} parent=0 // pred_region
    _
  $region25: #{bert_timeseries_forward.12} parent=0 // pred_fallthru
    _
  // Predicated region
  $region26: #{bert_timeseries_forward.12} parent=0 // pred_check
    _
  $region27: #{bert_timeseries_forward.12} parent=0 // pred_check_branch
    %125 = sbr.rel (0) target = $region29
  $region28: #{bert_timeseries_forward.12} parent=0 // pred_region
    _
  $region29: #{bert_timeseries_forward.12} parent=0 // pred_fallthru
    _

// kernel: bert_timeseries_forward.14
$region0: #{bert_timeseries_forward.14}
  #allocation0 [shape = 'u32[]', space=smem, size = 0x4, offset = 0x4, fixed_abs, tag = 'smem constant byte address 0x4 - core index']
  #allocation1 [shape = 'u32[144,128]{1,0:T(1,128)}', space=vmem, size = 0x12000, scoped, tag = 'internal scratch']
  #allocation2 [shape = 'f32[16,32]{1,0:T(8,128)}', space=vmem, size = 0x2000, scoped, tag = 'scratch operand']
  %s0 = inlined_call_operand.vmem [shape: bf16[16,32], index: 0, kind: input, shape index: {}]
  %s1 = inlined_call_operand.vmem [shape: bf16[32,32], index: 1, kind: input, shape index: {}]
  %s2 = inlined_call_operand.vmem [shape: f32[1,32], index: 2, kind: input, shape index: {}]
  %s3 = inlined_call_operand.vmem [shape: bf16[16,32], index: 3, kind: input, shape index: {}]
  %s4 = inlined_call_operand.vmem [shape: f32[1,32], index: 4, kind: input, shape index: {}]
  %s5 = inlined_call_operand.vmem [shape: f32[1,32], index: 5, kind: input, shape index: {}]
  %s6 = inlined_call_operand.vmem [shape: bf16[16,32], index: 6, kind: output, shape index: {}]
  %s7 = sld [smem:[#allocation0]]
  $region42: #{bert_timeseries_forward.14} parent=0
    _
  %s9 = ssub.s32 1, %s7
  %s10 = scalar_select 0, %s9, %s7
  // Predicated region
  $region2: #{bert_timeseries_forward.14} parent=0 // pred_check
    _
  $region3: #{bert_timeseries_forward.14} parent=0 // pred_check_branch
    %12 = sbr.rel (0) target = $region5
  $region4: #{bert_timeseries_forward.14} parent=0 // pred_region
    _
  $region5: #{bert_timeseries_forward.14} parent=0 // pred_fallthru
    _
  // Predicated region
  $region6: #{bert_timeseries_forward.14} parent=0 // pred_check
    _
  $region7: #{bert_timeseries_forward.14} parent=0 // pred_check_branch
    %14 = sbr.rel (0) target = $region9
  $region8: #{bert_timeseries_forward.14} parent=0 // pred_region
    _
  $region9: #{bert_timeseries_forward.14} parent=0 // pred_fallthru
    _
  // Predicated region
  $region10: #{bert_timeseries_forward.14} parent=0 // pred_check
    _
  $region11: #{bert_timeseries_forward.14} parent=0 // pred_check_branch
    %16 = sbr.rel (0) target = $region13
  $region12: #{bert_timeseries_forward.14} parent=0 // pred_region
    _
  $region13: #{bert_timeseries_forward.14} parent=0 // pred_fallthru
    _
  // Predicated region
  $region14: #{bert_timeseries_forward.14} parent=0 // pred_check
    _
  $region15: #{bert_timeseries_forward.14} parent=0 // pred_check_branch
    %18 = sbr.rel (0) target = $region17
  $region16: #{bert_timeseries_forward.14} parent=0 // pred_region
    _
  $region17: #{bert_timeseries_forward.14} parent=0 // pred_fallthru
    _
  // Predicated region
  $region18: #{bert_timeseries_forward.14} parent=0 // pred_check
    _
  $region19: #{bert_timeseries_forward.14} parent=0 // pred_check_branch
    %20 = sbr.rel (0) target = $region21
  $region20: #{bert_timeseries_forward.14} parent=0 // pred_region
    _
  $region21: #{bert_timeseries_forward.14} parent=0 // pred_fallthru
    _
  // Predicated region
  $region22: #{bert_timeseries_forward.14} parent=0 // pred_check
    _
  $region23: #{bert_timeseries_forward.14} parent=0 // pred_check_branch
    %22 = sbr.rel (0) target = $region25
  $region24: #{bert_timeseries_forward.14} parent=0 // pred_region
    _
  $region25: #{bert_timeseries_forward.14} parent=0 // pred_fallthru
    _
  %p24 = scmp.eq.s32.totalorder 0, 0
  // Predicated region
  $region26: #{bert_timeseries_forward.14} parent=0 // pred_check
    %p25 = pneg %p24
  $region27: #{bert_timeseries_forward.14} parent=0 // pred_check_branch
    %27 = sbr.rel (%p25) target = $region29
  $region28: #{bert_timeseries_forward.14} parent=0 // pred_region
    %vm28 = vcmask 261120
    %29 = vst.msk [vmem:[#allocation2] sm:$0xff] %vm28, 0.0
    %30 = vst.msk [vmem:[#allocation2 + $0x8] sm:$0xff] %vm28, 0.0
  $region29: #{bert_timeseries_forward.14} parent=0 // pred_fallthru
    _
  %v31 = vld [vmem:[#allocation2] sm:$0xff]
  %v32 = vld [vmem:[#allocation2 + $0x8] sm:$0xff]
  %v33 = vld [vmem:[%s0] sm:$0xf]
  %v34 = vld [vmem:[%s0 + $0x4] sm:$0xf]
  %v35 = vld [vmem:[%s1] sm:$0xf]
  %v36 = vld [vmem:[%s1 + $0x4] sm:$0xf]
  %v37 = vld [vmem:[%s1 + $0x8] sm:$0xf]
  %v38 = vld [vmem:[%s1 + $0xc] sm:$0xf]
  %v41 = vunpack.c.l.b16 %v33
  %v42 = vunpack.c.l.b16 %v34
  %v43 = vpack.c.b16 %v42, %v41
  %v48 = vunpack.c.l.b16 %v35
  %v49 = vunpack.c.l.b16 %v36
  %v50 = vunpack.c.l.b16 %v37
  %v51 = vunpack.c.l.b16 %v38
  %v52 = vpack.c.b16 %v49, %v48
  %v53 = vpack.c.b16 %v51, %v50
  %vm56 = vcmask 261120
  %v58 = vsel %vm56, %v43, 0
  %60 = vmatprep.subr.bf16.mxu0 0
  %61 = vmatpush1.bf16.msra.mxu0 %v52
  %62 = vmatprep.subr.bf16.mxu0 0
  %63 = vmatpush1.bf16.msra.mxu0 %v53
  %64 = vmatprep.subr.bf16.mxu0 0
  %65 = vmatpush1.bf16.msra.mxu0 0
  %66 = vmatprep.subr.bf16.mxu0 0
  %67 = vmatpush1.bf16.msra.mxu0 0
  %68 = vmatprep.subr.bf16.mxu0 0
  %69 = vmatpush1.bf16.msra.mxu0 0
  %70 = vmatprep.subr.bf16.mxu0 0
  %71 = vmatpush1.bf16.msra.mxu0 0
  %72 = vmatprep.subr.bf16.mxu0 0
  %73 = vmatpush1.bf16.msra.mxu0 0
  %74 = vmatprep.subr.bf16.mxu0 0
  %75 = vmatpush1.bf16.msra.mxu0 0
  %76 = vmatprep.subr.bf16.mxu0 0
  %77 = vmatpush1.bf16.msra.mxu0 0
  %78 = vmatprep.subr.bf16.mxu0 0
  %79 = vmatpush1.bf16.msra.mxu0 0
  %80 = vmatprep.subr.bf16.mxu0 0
  %81 = vmatpush1.bf16.msra.mxu0 0
  %82 = vmatprep.subr.bf16.mxu0 0
  %83 = vmatpush1.bf16.msra.mxu0 0
  %84 = vmatprep.subr.bf16.mxu0 0
  %85 = vmatpush1.bf16.msra.mxu0 0
  %86 = vmatprep.subr.bf16.mxu0 0
  %87 = vmatpush1.bf16.msra.mxu0 0
  %88 = vmatprep.subr.bf16.mxu0 0
  %89 = vmatpush1.bf16.msra.mxu0 0
  %90 = vmatprep.subr.bf16.mxu0 0
  %91 = vmatpush1.bf16.msra.mxu0 0
  %92 = vmatprep.mubr.bf16.mxu0 0
  %93 = vmatmul.mubr.bf16.gmra.mrb[0].mxu0 %v58
  %v94 = vpop.f32.mrb[0].mxu0
  %v95 = vadd.f32 0.0, %v94
  %v96 = vpop.f32.mrb[0].mxu0
  %v97 = vpop.f32.mrb[0].mxu0
  %v98 = vadd.f32 0.0, %v97
  %v99 = vpop.f32.mrb[0].mxu0
  %100 = vdwg.mxu0
  %v101 = vadd.f32 %v31, %v95
  %v102 = vadd.f32 %v32, %v98
  %103 = vst.msk [vmem:[#allocation2] sm:$0xff] %vm56, %v101
  %104 = vst.msk [vmem:[#allocation2 + $0x8] sm:$0xff] %vm56, %v102
  // Predicated region
  $region30: #{bert_timeseries_forward.14} parent=0 // pred_check
    %p105 = pneg %p24
  $region31: #{bert_timeseries_forward.14} parent=0 // pred_check_branch
    %107 = sbr.rel (%p105) target = $region33
  $region32: #{bert_timeseries_forward.14} parent=0 // pred_region
    %v108 = vld [vmem:[#allocation2] sm:$0xff]
    %v109 = vld [vmem:[#allocation2 + $0x8] sm:$0xff]
    %v110 = vld [vmem:[%s2] sm:$0x1]
    %v112 = vlaneseq
    %v113 = vshrl.u32 %v112, 7
    %v114 = vsub.s32 0, %v113
    %v115 = vrot.slane %v110, %v114
    %v117 = vadd.f32 %v108, %v115
    %v118 = vadd.f32 %v109, %v115
    %v119 = vld [vmem:[%s3] sm:$0xf]
    %v120 = vld [vmem:[%s3 + $0x4] sm:$0xf]
    %v121 = vunpack.c.l.bf16 %v119
    %v122 = vunpack.c.l.bf16 %v120
    %v123 = vadd.f32 %v117, %v121
    %v124 = vadd.f32 %v118, %v122
    %v125 = vsel %vm56, %v123, 0.0
    %126 = vadd.xlane.f32.xlu0 %v125
    %v127 = vpop.xlane.xlu0 %126
    %v128 = vsel %vm56, %v124, 0.0
    %129 = vadd.xlane.f32.xlu0 %v128
    %v130 = vpop.xlane.xlu0 %129
    %v131 = vrcp.pop 32.0
    %v132 = vmul.f32 %v127, %v131
    %v133 = vmul.f32 %v130, %v131
    %v134 = vsub.f32 %v123, %v132
    %v135 = vsub.f32 %v124, %v133
    %v136 = vmul.f32 %v134, %v134
    %v137 = vmul.f32 %v135, %v135
    %v138 = vsel %vm56, %v136, 0.0
    %139 = vadd.xlane.f32.xlu0 %v138
    %v140 = vpop.xlane.xlu0 %139
    %v141 = vsel %vm56, %v137, 0.0
    %142 = vadd.xlane.f32.xlu0 %v141
    %v143 = vpop.xlane.xlu0 %142
    %v144 = vmul.f32 %v140, %v131
    %v145 = vmul.f32 %v143, %v131
    %v146 = vadd.f32 %v144, 1e-05
    %v147 = vadd.f32 %v145, 1e-05
    %v148 = vrsqrt.pop %v146
    %v149 = vrsqrt.pop %v147
    %v150 = vmul.f32 %v134, %v148
    %v151 = vmul.f32 %v135, %v149
    %v152 = vld [vmem:[%s4] sm:$0x1]
    %v154 = vlaneseq
    %v155 = vshrl.u32 %v154, 7
    %v156 = vsub.s32 0, %v155
    %v157 = vrot.slane %v152, %v156
    %v159 = vmul.f32 %v150, %v157
    %v160 = vmul.f32 %v151, %v157
    %v161 = vld [vmem:[%s5] sm:$0x1]
    %v163 = vlaneseq
    %v164 = vshrl.u32 %v163, 7
    %v165 = vsub.s32 0, %v164
    %v166 = vrot.slane %v161, %v165
    %v168 = vadd.f32 %v159, %v166
    %v169 = vadd.f32 %v160, %v166
    %v170 = vpack.c.bf16 %v169, %v168
    %v172 = vunpack.c.l.b16 %v170
    %v173 = vunpack.c.h.b16 %v170
    %v174 = vpack.c.b16 %v172, %v172
    %v175 = vpack.c.b16 %v173, %v173
    %vm178 = vcmask 257024
    %179 = vst.msk [vmem:[%s6] sm:$0xf] %vm178, %v174
    %180 = vst.msk [vmem:[%s6 + $0x4] sm:$0xf] %vm178, %v175
  $region33: #{bert_timeseries_forward.14} parent=0 // pred_fallthru
    _
  // Predicated region
  $region34: #{bert_timeseries_forward.14} parent=0 // pred_check
    _
  $region35: #{bert_timeseries_forward.14} parent=0 // pred_check_branch
    %182 = sbr.rel (0) target = $region37
  $region36: #{bert_timeseries_forward.14} parent=0 // pred_region
    _
  $region37: #{bert_timeseries_forward.14} parent=0 // pred_fallthru
    _
  // Predicated region
  $region38: #{bert_timeseries_forward.14} parent=0 // pred_check
    _
  $region39: #{bert_timeseries_forward.14} parent=0 // pred_check_branch
    %184 = sbr.rel (0) target = $region41
  $region40: #{bert_timeseries_forward.14} parent=0 // pred_region
    _
  $region41: #{bert_timeseries_forward.14} parent=0 // pred_fallthru
    _

// kernel: bert_timeseries_forward.15
$region0: #{bert_timeseries_forward.15}
  #allocation0 [shape = 'u32[]', space=smem, size = 0x4, offset = 0x4, fixed_abs, tag = 'smem constant byte address 0x4 - core index']
  #allocation1 [shape = 'u32[144,128]{1,0:T(1,128)}', space=vmem, size = 0x12000, scoped, tag = 'internal scratch']
  #allocation2 [shape = 'f32[16,64]{1,0:T(8,128)}', space=vmem, size = 0x2000, scoped, tag = 'scratch operand']
  %s0 = inlined_call_operand.vmem [shape: bf16[16,32], index: 0, kind: input, shape index: {}]
  %s1 = inlined_call_operand.vmem [shape: bf16[32,64], index: 1, kind: input, shape index: {}]
  %s2 = inlined_call_operand.vmem [shape: f32[1,64], index: 2, kind: input, shape index: {}]
  %s3 = inlined_call_operand.vmem [shape: bf16[16,64], index: 3, kind: output, shape index: {}]
  %s4 = sld [smem:[#allocation0]]
  $region30: #{bert_timeseries_forward.15} parent=0
    _
  %s6 = ssub.s32 1, %s4
  %s7 = scalar_select 0, %s6, %s4
  // Predicated region
  $region2: #{bert_timeseries_forward.15} parent=0 // pred_check
    _
  $region3: #{bert_timeseries_forward.15} parent=0 // pred_check_branch
    %9 = sbr.rel (0) target = $region5
  $region4: #{bert_timeseries_forward.15} parent=0 // pred_region
    _
  $region5: #{bert_timeseries_forward.15} parent=0 // pred_fallthru
    _
  // Predicated region
  $region6: #{bert_timeseries_forward.15} parent=0 // pred_check
    _
  $region7: #{bert_timeseries_forward.15} parent=0 // pred_check_branch
    %11 = sbr.rel (0) target = $region9
  $region8: #{bert_timeseries_forward.15} parent=0 // pred_region
    _
  $region9: #{bert_timeseries_forward.15} parent=0 // pred_fallthru
    _
  // Predicated region
  $region10: #{bert_timeseries_forward.15} parent=0 // pred_check
    _
  $region11: #{bert_timeseries_forward.15} parent=0 // pred_check_branch
    %13 = sbr.rel (0) target = $region13
  $region12: #{bert_timeseries_forward.15} parent=0 // pred_region
    _
  $region13: #{bert_timeseries_forward.15} parent=0 // pred_fallthru
    _
  %p15 = scmp.eq.s32.totalorder 0, 0
  // Predicated region
  $region14: #{bert_timeseries_forward.15} parent=0 // pred_check
    %p16 = pneg %p15
  $region15: #{bert_timeseries_forward.15} parent=0 // pred_check_branch
    %18 = sbr.rel (%p16) target = $region17
  $region16: #{bert_timeseries_forward.15} parent=0 // pred_region
    %vm19 = vcmask 523264
    %20 = vst.msk [vmem:[#allocation2] sm:$0xff] %vm19, 0.0
    %21 = vst.msk [vmem:[#allocation2 + $0x8] sm:$0xff] %vm19, 0.0
  $region17: #{bert_timeseries_forward.15} parent=0 // pred_fallthru
    _
  %v22 = vld [vmem:[#allocation2] sm:$0xff]
  %v23 = vld [vmem:[#allocation2 + $0x8] sm:$0xff]
  %v24 = vld [vmem:[%s0] sm:$0xf]
  %v25 = vld [vmem:[%s0 + $0x4] sm:$0xf]
  %v26 = vld [vmem:[%s1] sm:$0xf]
  %v27 = vld [vmem:[%s1 + $0x4] sm:$0xf]
  %v28 = vld [vmem:[%s1 + $0x8] sm:$0xf]
  %v29 = vld [vmem:[%s1 + $0xc] sm:$0xf]
  %v32 = vunpack.c.l.b16 %v24
  %v33 = vunpack.c.l.b16 %v25
  %v34 = vpack.c.b16 %v33, %v32
  %v39 = vunpack.c.l.b16 %v26
  %v40 = vunpack.c.l.b16 %v27
  %v41 = vunpack.c.l.b16 %v28
  %v42 = vunpack.c.l.b16 %v29
  %v43 = vpack.c.b16 %v40, %v39
  %v44 = vpack.c.b16 %v42, %v41
  %vm47 = vcmask 261120
  %v49 = vsel %vm47, %v34, 0
  %51 = vmatprep.subr.bf16.mxu0 0
  %52 = vmatpush1.bf16.msra.mxu0 %v43
  %53 = vmatprep.subr.bf16.mxu0 0
  %54 = vmatpush1.bf16.msra.mxu0 %v44
  %55 = vmatprep.subr.bf16.mxu0 0
  %56 = vmatpush1.bf16.msra.mxu0 0
  %57 = vmatprep.subr.bf16.mxu0 0
  %58 = vmatpush1.bf16.msra.mxu0 0
  %59 = vmatprep.subr.bf16.mxu0 0
  %60 = vmatpush1.bf16.msra.mxu0 0
  %61 = vmatprep.subr.bf16.mxu0 0
  %62 = vmatpush1.bf16.msra.mxu0 0
  %63 = vmatprep.subr.bf16.mxu0 0
  %64 = vmatpush1.bf16.msra.mxu0 0
  %65 = vmatprep.subr.bf16.mxu0 0
  %66 = vmatpush1.bf16.msra.mxu0 0
  %67 = vmatprep.subr.bf16.mxu0 0
  %68 = vmatpush1.bf16.msra.mxu0 0
  %69 = vmatprep.subr.bf16.mxu0 0
  %70 = vmatpush1.bf16.msra.mxu0 0
  %71 = vmatprep.subr.bf16.mxu0 0
  %72 = vmatpush1.bf16.msra.mxu0 0
  %73 = vmatprep.subr.bf16.mxu0 0
  %74 = vmatpush1.bf16.msra.mxu0 0
  %75 = vmatprep.subr.bf16.mxu0 0
  %76 = vmatpush1.bf16.msra.mxu0 0
  %77 = vmatprep.subr.bf16.mxu0 0
  %78 = vmatpush1.bf16.msra.mxu0 0
  %79 = vmatprep.subr.bf16.mxu0 0
  %80 = vmatpush1.bf16.msra.mxu0 0
  %81 = vmatprep.subr.bf16.mxu0 0
  %82 = vmatpush1.bf16.msra.mxu0 0
  %83 = vmatprep.mubr.bf16.mxu0 0
  %84 = vmatmul.mubr.bf16.gmra.mrb[0].mxu0 %v49
  %v85 = vpop.f32.mrb[0].mxu0
  %v86 = vadd.f32 0.0, %v85
  %v87 = vpop.f32.mrb[0].mxu0
  %v88 = vpop.f32.mrb[0].mxu0
  %v89 = vadd.f32 0.0, %v88
  %v90 = vpop.f32.mrb[0].mxu0
  %91 = vdwg.mxu0
  %v92 = vadd.f32 %v22, %v86
  %v93 = vadd.f32 %v23, %v89
  %vm94 = vcmask 523264
  %95 = vst.msk [vmem:[#allocation2] sm:$0xff] %vm94, %v92
  %96 = vst.msk [vmem:[#allocation2 + $0x8] sm:$0xff] %vm94, %v93
  // Predicated region
  $region18: #{bert_timeseries_forward.15} parent=0 // pred_check
    %p97 = pneg %p15
  $region19: #{bert_timeseries_forward.15} parent=0 // pred_check_branch
    %99 = sbr.rel (%p97) target = $region21
  $region20: #{bert_timeseries_forward.15} parent=0 // pred_region
    %v100 = vld [vmem:[#allocation2] sm:$0xff]
    %v101 = vld [vmem:[#allocation2 + $0x8] sm:$0xff]
    %v102 = vld [vmem:[%s2] sm:$0x1]
    %v104 = vlaneseq
    %v105 = vshrl.u32 %v104, 7
    %v106 = vsub.s32 0, %v105
    %v107 = vrot.slane %v102, %v106
    %v109 = vadd.f32 %v100, %v107
    %v110 = vadd.f32 %v101, %v107
    %v111 = vmul.f32 %v109, 0.5
    %v112 = vmul.f32 %v110, 0.5
    %v113 = vmul.f32 %v109, 0.70710677
    %v114 = vmul.f32 %v110, 0.70710677
    %v115 = vand.u32 2147483647, %v113
    %v116 = vand.u32 2147483647, %v114
    %v117 = vmul.f32 %v115, 0.3275911
    %v118 = vmul.f32 %v116, 0.3275911
    %v119 = vadd.f32 %v117, 1.0
    %v120 = vadd.f32 %v118, 1.0
    %v121 = vrcp.pop %v119
    %v122 = vmul.f32 1.0, %v121
    %v123 = vrcp.pop %v120
    %v124 = vmul.f32 1.0, %v123
    %v125 = vmul.f32 %v122, 1.0614054
    %v126 = vmul.f32 %v124, 1.0614054
    %v127 = vadd.f32 %v125, -1.4531521
    %v128 = vadd.f32 %v126, -1.4531521
    %v129 = vmul.f32 %v127, %v122
    %v130 = vmul.f32 %v128, %v124
    %v131 = vadd.f32 %v129, 1.4214138
    %v132 = vadd.f32 %v130, 1.4214138
    %v133 = vmul.f32 %v131, %v122
    %v134 = vmul.f32 %v132, %v124
    %v135 = vadd.f32 %v133, -0.28449672
    %v136 = vadd.f32 %v134, -0.28449672
    %v137 = vmul.f32 %v135, %v122
    %v138 = vmul.f32 %v136, %v124
    %v139 = vadd.f32 %v137, 0.2548296
    %v140 = vadd.f32 %v138, 0.2548296
    %v141 = vmul.f32 %v139, %v122
    %v142 = vmul.f32 %v140, %v124
    %v143 = vsub.f32 0.0, %v115
    %v144 = vsub.f32 0.0, %v116
    %v145 = vmul.f32 %v143, %v115
    %v146 = vmul.f32 %v144, %v116
    %v147 = vmul.f32 %v145, 1.442695
    %v148 = vpow.pop %v147
    %v149 = vmul.f32 %v146, 1.442695
    %v150 = vpow.pop %v149
    %v151 = vmul.f32 %v141, %v148
    %v152 = vmul.f32 %v142, %v150
    %v153 = vsub.f32 1.0, %v151
    %v154 = vsub.f32 1.0, %v152
    %vm155 = vcmp.ge.f32.partialorder %v113, 0.0
    %vm156 = vcmp.ge.f32.partialorder %v114, 0.0
    %v157 = vsub.f32 0.0, %v153
    %v158 = vsub.f32 0.0, %v154
    %v159 = vsel %vm155, %v153, %v157
    %v160 = vsel %vm156, %v154, %v158
    %v161 = vadd.f32 %v159, 1.0
    %v162 = vadd.f32 %v160, 1.0
    %v163 = vmul.f32 %v111, %v161
    %v164 = vmul.f32 %v112, %v162
    %v165 = vpack.c.bf16 %v164, %v163
    %v167 = vunpack.c.l.b16 %v165
    %v168 = vunpack.c.h.b16 %v165
    %v169 = vpack.c.b16 %v167, %v167
    %v170 = vpack.c.b16 %v168, %v168
    %vm173 = vcmask 519168
    %174 = vst.msk [vmem:[%s3] sm:$0xf] %vm173, %v169
    %175 = vst.msk [vmem:[%s3 + $0x4] sm:$0xf] %vm173, %v170
  $region21: #{bert_timeseries_forward.15} parent=0 // pred_fallthru
    _
  // Predicated region
  $region22: #{bert_timeseries_forward.15} parent=0 // pred_check
    _
  $region23: #{bert_timeseries_forward.15} parent=0 // pred_check_branch
    %177 = sbr.rel (0) target = $region25
  $region24: #{bert_timeseries_forward.15} parent=0 // pred_region
    _
  $region25: #{bert_timeseries_forward.15} parent=0 // pred_fallthru
    _
  // Predicated region
  $region26: #{bert_timeseries_forward.15} parent=0 // pred_check
    _
  $region27: #{bert_timeseries_forward.15} parent=0 // pred_check_branch
    %179 = sbr.rel (0) target = $region29
  $region28: #{bert_timeseries_forward.15} parent=0 // pred_region
    _
  $region29: #{bert_timeseries_forward.15} parent=0 // pred_fallthru
    _

// kernel: bert_timeseries_forward.13
$region0: #{bert_timeseries_forward.13}
  #allocation0 [shape = 'u32[]', space=smem, size = 0x4, offset = 0x4, fixed_abs, tag = 'smem constant byte address 0x4 - core index']
  #allocation1 [shape = 'u32[144,128]{1,0:T(1,128)}', space=vmem, size = 0x12000, scoped, tag = 'internal scratch']
  %s0 = inlined_call_operand.vmem [shape: bf16[2,8,96], index: 0, kind: input, shape index: {}]
  %s1 = inlined_call_operand.vmem [shape: bf16[2,8,32], index: 1, kind: output, shape index: {}]
  %s2 = sld [smem:[#allocation0]]
  $region37: #{bert_timeseries_forward.13} parent=0
    _
  %s4 = ssub.s32 1, %s2
  %s5 = scalar_select 0, %s4, %s2
  loop: start=0, step=1, limit=4
  $region2: #{bert_timeseries_forward.13} parent=0 // loop_pre_header
    _
  $region3: #{bert_timeseries_forward.13} parent=0 // loop_header
    %s7 = sphi 0, %s11
    %p8 = scmp.ge.s32.totalorder %s7, 4
    %s17 = sphi 0, %s19
    %s20 = sphi 0, %s17
    %s21 = sphi 0, %s20
    %s37 = sphi 0, %s21
    %s43 = sphi 0, %s45
    %s46 = sphi 0, %s43
    %s47 = sphi 0, %s46
    %s63 = sphi 0, %s47
  $region4: #{bert_timeseries_forward.13} parent=0 // loop_header_branch
    %10 = sbr.rel (%p8) target = $region8
  $region5: #{bert_timeseries_forward.13} parent=0 // loop_body
    %s12 = ssub.s32 %s7, 1
    %s13 = ssub.s32 %s7, 2
    %s14 = sadd.s32 %s7, 1
    %s15 = ssub.s32 %s7, %s14
    %p16 = scmp.eq.s32.totalorder %s15, 0
    %s18 = sadd.s32 %s17, 1
    %s19 = scalar_select %p16, %s17, %s18
    %p22 = pneg %p16
    %p23 = scmp.eq.s32.totalorder %s7, 1
    %p24 = por %p22, %p23
    %p25 = scmp.ne.s32.totalorder %s17, %s20
    %p26 = scmp.eq.s32.totalorder %s7, 0
    %p27 = por %p25, %p26
    %p28 = scmp.ne.s32.totalorder %s17, %s20
    %p29 = scmp.eq.s32.totalorder %s12, 1
    %p30 = por %p28, %p29
    %p31 = scmp.ne.s32.totalorder %s20, %s21
    %p32 = scmp.eq.s32.totalorder %s12, 0
    %p33 = por %p31, %p32
    %p34 = scmp.ne.s32.totalorder %s20, %s21
    %p35 = scmp.eq.s32.totalorder %s13, 1
    %p36 = por %p34, %p35
    %p38 = scmp.ne.s32.totalorder %s21, %s37
    %p39 = scmp.eq.s32.totalorder %s13, 0
    %p40 = por %p38, %p39
    %s41 = ssub.s32 %s7, %s14
    %p42 = scmp.eq.s32.totalorder %s41, 0
    %s44 = sadd.s32 %s43, 1
    %s45 = scalar_select %p42, %s43, %s44
    %p48 = pneg %p42
    %p49 = scmp.eq.s32.totalorder %s7, 1
    %p50 = por %p48, %p49
    %p51 = scmp.ne.s32.totalorder %s43, %s46
    %p52 = scmp.eq.s32.totalorder %s7, 0
    %p53 = por %p51, %p52
    %p54 = scmp.ne.s32.totalorder %s43, %s46
    %p55 = scmp.eq.s32.totalorder %s12, 1
    %p56 = por %p54, %p55
    %p57 = scmp.ne.s32.totalorder %s46, %s47
    %p58 = scmp.eq.s32.totalorder %s12, 0
    %p59 = por %p57, %p58
    %p60 = scmp.ne.s32.totalorder %s46, %s47
    %p61 = scmp.eq.s32.totalorder %s13, 1
    %p62 = por %p60, %p61
    %p64 = scmp.ne.s32.totalorder %s47, %s63
    %p65 = scmp.eq.s32.totalorder %s13, 0
    %p66 = por %p64, %p65
    %p67 = scmp.le.s32.totalorder 1, %s7
    %p68 = scmp.lt.s32.totalorder %s7, 3
    %p69 = pnand %p67, %p68
    %p70 = pneg %p69
    // Predicated region
    $region9: #{bert_timeseries_forward.13} parent=5 // pred_check
      _
    $region10: #{bert_timeseries_forward.13} parent=5 // pred_check_branch
      %72 = sbr.rel (%p69) target = $region12
    $region11: #{bert_timeseries_forward.13} parent=5 // pred_region
      %s73 = ssub.s32 %s7, 1
    $region12: #{bert_timeseries_forward.13} parent=5 // pred_fallthru
      _
    %p74 = scmp.lt.s32.totalorder %s7, 2
    // Predicated region
    $region13: #{bert_timeseries_forward.13} parent=5 // pred_check
      %p75 = pneg %p74
    $region14: #{bert_timeseries_forward.13} parent=5 // pred_check_branch
      %77 = sbr.rel (%p75) target = $region16
    $region15: #{bert_timeseries_forward.13} parent=5 // pred_region
      // Predicated region
      $region17: #{bert_timeseries_forward.13} parent=15 // pred_check
        %p78 = pneg %p27
      $region18: #{bert_timeseries_forward.13} parent=15 // pred_check_branch
        %80 = sbr.rel (%p78) target = $region20
      $region19: #{bert_timeseries_forward.13} parent=15 // pred_region
        %p81 = scmp.lt.s32.totalorder %s7, 1
        %s82 = scalar_select %p81, %s7, 1
        %s83 = smul.addr %s82, 4
        %s84 = scalar_lea.vmem %s0, %s83
      $region20: #{bert_timeseries_forward.13} parent=15 // pred_fallthru
        _
    $region16: #{bert_timeseries_forward.13} parent=5 // pred_fallthru
      _
    %p85 = scmp.le.s32.totalorder 1, %s7
    %p86 = scmp.lt.s32.totalorder %s7, 3
    %p87 = pnand %p85, %p86
    %p88 = pneg %p87
    // Predicated region
    $region21: #{bert_timeseries_forward.13} parent=5 // pred_check
      _
    $region22: #{bert_timeseries_forward.13} parent=5 // pred_check_branch
      %90 = sbr.rel (%p87) target = $region24
    $region23: #{bert_timeseries_forward.13} parent=5 // pred_region
      %s91 = ssub.s32 %s7, 1
      %p92 = scmp.lt.s32.totalorder %s12, 1
      %s93 = scalar_select %p92, %s12, 1
      %s94 = smul.addr %s93, 4
      %s95 = scalar_lea.vmem %s0, %s94
      %p96 = pneg %p33
      %p97 = pneg %p30
      %p98 = pneg %p59
      %p99 = pneg %p56
      %p100 = scmp.lt.s32.totalorder %s12, 1
      %s101 = scalar_select %p100, %s12, 1
      %s102 = smul.addr %s101, 4
      %s103 = scalar_lea.vmem %s1, %s102
      %p104 = scmp.lt.s32.totalorder %s12, 1
      %s105 = scalar_select %p104, %s12, 1
      %s106 = smul.addr %s105, 4
      %s107 = scalar_lea.vmem %s0, %s106
      %p108 = scmp.lt.s32.totalorder %s12, 1
      %s109 = scalar_select %p108, %s12, 1
      %s110 = smul.addr %s109, 4
      %s111 = scalar_lea.vmem %s1, %s110
      %v114 = vld [vmem:[%s107] sm:$0xf]
      %v115 = vmul.bf16 %v114, 1052065461
      %v117 = vunpack.c.l.b16 %v114
      %v118 = vpack.c.b16 %v117, %v117
      %119 = vrot.lane.b32.xlu0 %v118, 96
      %v120 = vpop.permute.xlu0 %119
      %vm121 = vcmask 64512
      %v123 = vsel %vm121, %v115, 0
      %v126 = vsel %vm121, %v120, 0
      %128 = vmatprep.subr.bf16.mxu0 0
      %129 = vmatpush1.bf16.xpose.msra.mxu0 %v126
      %130 = vmatprep.subr.bf16.mxu0 0
      %131 = vmatpush1.bf16.xpose.msra.mxu0 0
      %132 = vmatprep.subr.bf16.mxu0 0
      %133 = vmatpush1.bf16.xpose.msra.mxu0 0
      %134 = vmatprep.subr.bf16.mxu0 0
      %135 = vmatpush1.bf16.xpose.msra.mxu0 0
      %136 = vmatprep.subr.bf16.mxu0 0
      %137 = vmatpush1.bf16.xpose.msra.mxu0 0
      %138 = vmatprep.subr.bf16.mxu0 0
      %139 = vmatpush1.bf16.xpose.msra.mxu0 0
      %140 = vmatprep.subr.bf16.mxu0 0
      %141 = vmatpush1.bf16.xpose.msra.mxu0 0
      %142 = vmatprep.subr.bf16.mxu0 0
      %143 = vmatpush1.bf16.xpose.msra.mxu0 0
      %144 = vmatprep.subr.bf16.mxu0 0
      %145 = vmatpush1.bf16.xpose.msra.mxu0 0
      %146 = vmatprep.subr.bf16.mxu0 0
      %147 = vmatpush1.bf16.xpose.msra.mxu0 0
      %148 = vmatprep.subr.bf16.mxu0 0
      %149 = vmatpush1.bf16.xpose.msra.mxu0 0
      %150 = vmatprep.subr.bf16.mxu0 0
      %151 = vmatpush1.bf16.xpose.msra.mxu0 0
      %152 = vmatprep.subr.bf16.mxu0 0
      %153 = vmatpush1.bf16.xpose.msra.mxu0 0
      %154 = vmatprep.subr.bf16.mxu0 0
      %155 = vmatpush1.bf16.xpose.msra.mxu0 0
      %156 = vmatprep.subr.bf16.mxu0 0
      %157 = vmatpush1.bf16.xpose.msra.mxu0 0
      %158 = vmatprep.subr.bf16.mxu0 0
      %159 = vmatpush1.bf16.xpose.msra.mxu0 0
      %160 = vmatprep.mubr.bf16.mxu0 0
      %161 = vmatmul.mubr.bf16.gmra.mrb[0].mxu0 %v123
      %v162 = vpop.f32.mrb[0].mxu0
      %v163 = vadd.f32 0.0, %v162
      %v164 = vpop.f32.mrb[0].mxu0
      %v165 = vpop.f32.mrb[0].mxu0
      %v166 = vpop.f32.mrb[0].mxu0
      %167 = vdwg.mxu0
      %v168 = vsel %vm121, %v163, -inf
      %169 = vmax.xlane.f32.xlu0 %v168
      %v170 = vpop.xlane.xlu0 %169
      %v171 = vsub.f32 %v163, %v170
      %v172 = vmul.f32 %v171, 1.442695
      %v173 = vpow.pop %v172
      %v174 = vsel %vm121, %v173, 0.0
      %175 = vadd.xlane.f32.xlu0 %v174
      %v176 = vpop.xlane.xlu0 %175
      %v177 = vrcp.pop %v176
      %v178 = vmul.f32 %v173, %v177
      %v179 = vpack.c.bf16 %v178, %v178
      %180 = vrot.lane.b32.xlu0 %v118, 64
      %v181 = vpop.permute.xlu0 %180
      %v183 = vsel %vm121, %v179, 0
      %vm185 = vcmask 1043456
      %v187 = vsel %vm185, %v181, 0
      %189 = vmatprep.subr.bf16.mxu0 0
      %190 = vmatpush1.bf16.msra.mxu0 %v187
      %191 = vmatprep.subr.bf16.mxu0 0
      %192 = vmatpush1.bf16.msra.mxu0 0
      %193 = vmatprep.subr.bf16.mxu0 0
      %194 = vmatpush1.bf16.msra.mxu0 0
      %195 = vmatprep.subr.bf16.mxu0 0
      %196 = vmatpush1.bf16.msra.mxu0 0
      %197 = vmatprep.subr.bf16.mxu0 0
      %198 = vmatpush1.bf16.msra.mxu0 0
      %199 = vmatprep.subr.bf16.mxu0 0
      %200 = vmatpush1.bf16.msra.mxu0 0
      %201 = vmatprep.subr.bf16.mxu0 0
      %202 = vmatpush1.bf16.msra.mxu0 0
      %203 = vmatprep.subr.bf16.mxu0 0
      %204 = vmatpush1.bf16.msra.mxu0 0
      %205 = vmatprep.subr.bf16.mxu0 0
      %206 = vmatpush1.bf16.msra.mxu0 0
      %207 = vmatprep.subr.bf16.mxu0 0
      %208 = vmatpush1.bf16.msra.mxu0 0
      %209 = vmatprep.subr.bf16.mxu0 0
      %210 = vmatpush1.bf16.msra.mxu0 0
      %211 = vmatprep.subr.bf16.mxu0 0
      %212 = vmatpush1.bf16.msra.mxu0 0
      %213 = vmatprep.subr.bf16.mxu0 0
      %214 = vmatpush1.bf16.msra.mxu0 0
      %215 = vmatprep.subr.bf16.mxu0 0
      %216 = vmatpush1.bf16.msra.mxu0 0
      %217 = vmatprep.subr.bf16.mxu0 0
      %218 = vmatpush1.bf16.msra.mxu0 0
      %219 = vmatprep.subr.bf16.mxu0 0
      %220 = vmatpush1.bf16.msra.mxu0 0
      %221 = vmatprep.mubr.bf16.mxu0 0
      %222 = vmatmul.mubr.bf16.gmra.mrb[0].mxu0 %v183
      %v223 = vpop.f32.mrb[0].mxu0
      %v224 = vadd.f32 0.0, %v223
      %v225 = vpop.f32.mrb[0].mxu0
      %v226 = vpop.f32.mrb[0].mxu0
      %v227 = vpop.f32.mrb[0].mxu0
      %228 = vdwg.mxu0
      %v229 = vpack.c.bf16 %v224, %v224
      %vm230 = vcmask 60416
      %231 = vst.msk [vmem:[%s111] sm:$0xf] %vm230, %v229
      %v233 = vunpack.c.l.b16 %v115
      %v234 = vpack.c.b16 %v233, %v233
      %235 = vrot.lane.b32.xlu0 %v234, 120
      %v236 = vpop.permute.xlu0 %235
      %237 = vrot.lane.b32.xlu0 %v118, 88
      %v238 = vpop.permute.xlu0 %237
      %v240 = vsel %vm121, %v236, 0
      %v243 = vsel %vm121, %v238, 0
      %245 = vmatprep.subr.bf16.mxu0 0
      %246 = vmatpush1.bf16.xpose.msra.mxu0 %v243
      %247 = vmatprep.subr.bf16.mxu0 0
      %248 = vmatpush1.bf16.xpose.msra.mxu0 0
      %249 = vmatprep.subr.bf16.mxu0 0
      %250 = vmatpush1.bf16.xpose.msra.mxu0 0
      %251 = vmatprep.subr.bf16.mxu0 0
      %252 = vmatpush1.bf16.xpose.msra.mxu0 0
      %253 = vmatprep.subr.bf16.mxu0 0
      %254 = vmatpush1.bf16.xpose.msra.mxu0 0
      %255 = vmatprep.subr.bf16.mxu0 0
      %256 = vmatpush1.bf16.xpose.msra.mxu0 0
      %257 = vmatprep.subr.bf16.mxu0 0
      %258 = vmatpush1.bf16.xpose.msra.mxu0 0
      %259 = vmatprep.subr.bf16.mxu0 0
      %260 = vmatpush1.bf16.xpose.msra.mxu0 0
      %261 = vmatprep.subr.bf16.mxu0 0
      %262 = vmatpush1.bf16.xpose.msra.mxu0 0
      %263 = vmatprep.subr.bf16.mxu0 0
      %264 = vmatpush1.bf16.xpose.msra.mxu0 0
      %265 = vmatprep.subr.bf16.mxu0 0
      %266 = vmatpush1.bf16.xpose.msra.mxu0 0
      %267 = vmatprep.subr.bf16.mxu0 0
      %268 = vmatpush1.bf16.xpose.msra.mxu0 0
      %269 = vmatprep.subr.bf16.mxu0 0
      %270 = vmatpush1.bf16.xpose.msra.mxu0 0
      %271 = vmatprep.subr.bf16.mxu0 0
      %272 = vmatpush1.bf16.xpose.msra.mxu0 0
      %273 = vmatprep.subr.bf16.mxu0 0
      %274 = vmatpush1.bf16.xpose.msra.mxu0 0
      %275 = vmatprep.subr.bf16.mxu0 0
      %276 = vmatpush1.bf16.xpose.msra.mxu0 0
      %277 = vmatprep.mubr.bf16.mxu0 0
      %278 = vmatmul.mubr.bf16.gmra.mrb[0].mxu0 %v240
      %v279 = vpop.f32.mrb[0].mxu0
      %v280 = vadd.f32 0.0, %v279
      %v281 = vpop.f32.mrb[0].mxu0
      %v282 = vpop.f32.mrb[0].mxu0
      %v283 = vpop.f32.mrb[0].mxu0
      %284 = vdwg.mxu0
      %v285 = vsel %vm121, %v280, -inf
      %286 = vmax.xlane.f32.xlu0 %v285
      %v287 = vpop.xlane.xlu0 %286
      %v288 = vsub.f32 %v280, %v287
      %v289 = vmul.f32 %v288, 1.442695
      %v290 = vpow.pop %v289
      %v291 = vsel %vm121, %v290, 0.0
      %292 = vadd.xlane.f32.xlu0 %v291
      %v293 = vpop.xlane.xlu0 %292
      %v294 = vrcp.pop %v293
      %v295 = vmul.f32 %v290, %v294
      %v296 = vpack.c.bf16 %v295, %v295
      %297 = vrot.lane.b32.xlu0 %v118, 56
      %v298 = vpop.permute.xlu0 %297
      %v300 = vsel %vm121, %v296, 0
      %v303 = vsel %vm185, %v298, 0
      %305 = vmatprep.subr.bf16.mxu0 0
      %306 = vmatpush1.bf16.msra.mxu0 %v303
      %307 = vmatprep.subr.bf16.mxu0 0
      %308 = vmatpush1.bf16.msra.mxu0 0
      %309 = vmatprep.subr.bf16.mxu0 0
      %310 = vmatpush1.bf16.msra.mxu0 0
      %311 = vmatprep.subr.bf16.mxu0 0
      %312 = vmatpush1.bf16.msra.mxu0 0
      %313 = vmatprep.subr.bf16.mxu0 0
      %314 = vmatpush1.bf16.msra.mxu0 0
      %315 = vmatprep.subr.bf16.mxu0 0
      %316 = vmatpush1.bf16.msra.mxu0 0
      %317 = vmatprep.subr.bf16.mxu0 0
      %318 = vmatpush1.bf16.msra.mxu0 0
      %319 = vmatprep.subr.bf16.mxu0 0
      %320 = vmatpush1.bf16.msra.mxu0 0
      %321 = vmatprep.subr.bf16.mxu0 0
      %322 = vmatpush1.bf16.msra.mxu0 0
      %323 = vmatprep.subr.bf16.mxu0 0
      %324 = vmatpush1.bf16.msra.mxu0 0
      %325 = vmatprep.subr.bf16.mxu0 0
      %326 = vmatpush1.bf16.msra.mxu0 0
      %327 = vmatprep.subr.bf16.mxu0 0
      %328 = vmatpush1.bf16.msra.mxu0 0
      %329 = vmatprep.subr.bf16.mxu0 0
      %330 = vmatpush1.bf16.msra.mxu0 0
      %331 = vmatprep.subr.bf16.mxu0 0
      %332 = vmatpush1.bf16.msra.mxu0 0
      %333 = vmatprep.subr.bf16.mxu0 0
      %334 = vmatpush1.bf16.msra.mxu0 0
      %335 = vmatprep.subr.bf16.mxu0 0
      %336 = vmatpush1.bf16.msra.mxu0 0
      %337 = vmatprep.mubr.bf16.mxu0 0
      %338 = vmatmul.mubr.bf16.gmra.mrb[0].mxu0 %v300
      %v339 = vpop.f32.mrb[0].mxu0
      %v340 = vadd.f32 0.0, %v339
      %v341 = vpop.f32.mrb[0].mxu0
      %v342 = vpop.f32.mrb[0].mxu0
      %v343 = vpop.f32.mrb[0].mxu0
      %344 = vdwg.mxu0
      %v345 = vpack.c.bf16 %v340, %v340
      %v347 = vunpack.c.l.b16 %v345
      %v348 = vpack.c.b16 %v347, %v347
      %349 = vrot.lane.b32.xlu0 %v348, 8
      %v350 = vpop.permute.xlu0 %349
      %vm352 = vcmask 126016
      %353 = vst.msk [vmem:[%s111] sm:$0xf] %vm352, %v350
      %354 = vrot.lane.b32.xlu0 %v234, 112
      %v355 = vpop.permute.xlu0 %354
      %356 = vrot.lane.b32.xlu0 %v118, 80
      %v357 = vpop.permute.xlu0 %356
      %v359 = vsel %vm121, %v355, 0
      %v362 = vsel %vm121, %v357, 0
      %364 = vmatprep.subr.bf16.mxu0 0
      %365 = vmatpush1.bf16.xpose.msra.mxu0 %v362
      %366 = vmatprep.subr.bf16.mxu0 0
      %367 = vmatpush1.bf16.xpose.msra.mxu0 0
      %368 = vmatprep.subr.bf16.mxu0 0
      %369 = vmatpush1.bf16.xpose.msra.mxu0 0
      %370 = vmatprep.subr.bf16.mxu0 0
      %371 = vmatpush1.bf16.xpose.msra.mxu0 0
      %372 = vmatprep.subr.bf16.mxu0 0
      %373 = vmatpush1.bf16.xpose.msra.mxu0 0
      %374 = vmatprep.subr.bf16.mxu0 0
      %375 = vmatpush1.bf16.xpose.msra.mxu0 0
      %376 = vmatprep.subr.bf16.mxu0 0
      %377 = vmatpush1.bf16.xpose.msra.mxu0 0
      %378 = vmatprep.subr.bf16.mxu0 0
      %379 = vmatpush1.bf16.xpose.msra.mxu0 0
      %380 = vmatprep.subr.bf16.mxu0 0
      %381 = vmatpush1.bf16.xpose.msra.mxu0 0
      %382 = vmatprep.subr.bf16.mxu0 0
      %383 = vmatpush1.bf16.xpose.msra.mxu0 0
      %384 = vmatprep.subr.bf16.mxu0 0
      %385 = vmatpush1.bf16.xpose.msra.mxu0 0
      %386 = vmatprep.subr.bf16.mxu0 0
      %387 = vmatpush1.bf16.xpose.msra.mxu0 0
      %388 = vmatprep.subr.bf16.mxu0 0
      %389 = vmatpush1.bf16.xpose.msra.mxu0 0
      %390 = vmatprep.subr.bf16.mxu0 0
      %391 = vmatpush1.bf16.xpose.msra.mxu0 0
      %392 = vmatprep.subr.bf16.mxu0 0
      %393 = vmatpush1.bf16.xpose.msra.mxu0 0
      %394 = vmatprep.subr.bf16.mxu0 0
      %395 = vmatpush1.bf16.xpose.msra.mxu0 0
      %396 = vmatprep.mubr.bf16.mxu0 0
      %397 = vmatmul.mubr.bf16.gmra.mrb[0].mxu0 %v359
      %v398 = vpop.f32.mrb[0].mxu0
      %v399 = vadd.f32 0.0, %v398
      %v400 = vpop.f32.mrb[0].mxu0
      %v401 = vpop.f32.mrb[0].mxu0
      %v402 = vpop.f32.mrb[0].mxu0
      %403 = vdwg.mxu0
      %v404 = vsel %vm121, %v399, -inf
      %405 = vmax.xlane.f32.xlu0 %v404
      %v406 = vpop.xlane.xlu0 %405
      %v407 = vsub.f32 %v399, %v406
      %v408 = vmul.f32 %v407, 1.442695
      %v409 = vpow.pop %v408
      %v410 = vsel %vm121, %v409, 0.0
      %411 = vadd.xlane.f32.xlu0 %v410
      %v412 = vpop.xlane.xlu0 %411
      %v413 = vrcp.pop %v412
      %v414 = vmul.f32 %v409, %v413
      %v415 = vpack.c.bf16 %v414, %v414
      %416 = vrot.lane.b32.xlu0 %v118, 48
      %v417 = vpop.permute.xlu0 %416
      %v419 = vsel %vm121, %v415, 0
      %v422 = vsel %vm185, %v417, 0
      %424 = vmatprep.subr.bf16.mxu0 0
      %425 = vmatpush1.bf16.msra.mxu0 %v422
      %426 = vmatprep.subr.bf16.mxu0 0
      %427 = vmatpush1.bf16.msra.mxu0 0
      %428 = vmatprep.subr.bf16.mxu0 0
      %429 = vmatpush1.bf16.msra.mxu0 0
      %430 = vmatprep.subr.bf16.mxu0 0
      %431 = vmatpush1.bf16.msra.mxu0 0
      %432 = vmatprep.subr.bf16.mxu0 0
      %433 = vmatpush1.bf16.msra.mxu0 0
      %434 = vmatprep.subr.bf16.mxu0 0
      %435 = vmatpush1.bf16.msra.mxu0 0
      %436 = vmatprep.subr.bf16.mxu0 0
      %437 = vmatpush1.bf16.msra.mxu0 0
      %438 = vmatprep.subr.bf16.mxu0 0
      %439 = vmatpush1.bf16.msra.mxu0 0
      %440 = vmatprep.subr.bf16.mxu0 0
      %441 = vmatpush1.bf16.msra.mxu0 0
      %442 = vmatprep.subr.bf16.mxu0 0
      %443 = vmatpush1.bf16.msra.mxu0 0
      %444 = vmatprep.subr.bf16.mxu0 0
      %445 = vmatpush1.bf16.msra.mxu0 0
      %446 = vmatprep.subr.bf16.mxu0 0
      %447 = vmatpush1.bf16.msra.mxu0 0
      %448 = vmatprep.subr.bf16.mxu0 0
      %449 = vmatpush1.bf16.msra.mxu0 0
      %450 = vmatprep.subr.bf16.mxu0 0
      %451 = vmatpush1.bf16.msra.mxu0 0
      %452 = vmatprep.subr.bf16.mxu0 0
      %453 = vmatpush1.bf16.msra.mxu0 0
      %454 = vmatprep.subr.bf16.mxu0 0
      %455 = vmatpush1.bf16.msra.mxu0 0
      %456 = vmatprep.mubr.bf16.mxu0 0
      %457 = vmatmul.mubr.bf16.gmra.mrb[0].mxu0 %v419
      %v458 = vpop.f32.mrb[0].mxu0
      %v459 = vadd.f32 0.0, %v458
      %v460 = vpop.f32.mrb[0].mxu0
      %v461 = vpop.f32.mrb[0].mxu0
      %v462 = vpop.f32.mrb[0].mxu0
      %463 = vdwg.mxu0
      %v464 = vpack.c.bf16 %v459, %v459
      %v466 = vunpack.c.l.b16 %v464
      %v467 = vpack.c.b16 %v466, %v466
      %468 = vrot.lane.b32.xlu0 %v467, 16
      %v469 = vpop.permute.xlu0 %468
      %vm471 = vcmask 191616
      %472 = vst.msk [vmem:[%s111] sm:$0xf] %vm471, %v469
      %473 = vrot.lane.b32.xlu0 %v234, 104
      %v474 = vpop.permute.xlu0 %473
      %475 = vrot.lane.b32.xlu0 %v118, 72
      %v476 = vpop.permute.xlu0 %475
      %v478 = vsel %vm121, %v474, 0
      %v481 = vsel %vm121, %v476, 0
      %483 = vmatprep.subr.bf16.mxu0 0
      %484 = vmatpush1.bf16.xpose.msra.mxu0 %v481
      %485 = vmatprep.subr.bf16.mxu0 0
      %486 = vmatpush1.bf16.xpose.msra.mxu0 0
      %487 = vmatprep.subr.bf16.mxu0 0
      %488 = vmatpush1.bf16.xpose.msra.mxu0 0
      %489 = vmatprep.subr.bf16.mxu0 0
      %490 = vmatpush1.bf16.xpose.msra.mxu0 0
      %491 = vmatprep.subr.bf16.mxu0 0
      %492 = vmatpush1.bf16.xpose.msra.mxu0 0
      %493 = vmatprep.subr.bf16.mxu0 0
      %494 = vmatpush1.bf16.xpose.msra.mxu0 0
      %495 = vmatprep.subr.bf16.mxu0 0
      %496 = vmatpush1.bf16.xpose.msra.mxu0 0
      %497 = vmatprep.subr.bf16.mxu0 0
      %498 = vmatpush1.bf16.xpose.msra.mxu0 0
      %499 = vmatprep.subr.bf16.mxu0 0
      %500 = vmatpush1.bf16.xpose.msra.mxu0 0
      %501 = vmatprep.subr.bf16.mxu0 0
      %502 = vmatpush1.bf16.xpose.msra.mxu0 0
      %503 = vmatprep.subr.bf16.mxu0 0
      %504 = vmatpush1.bf16.xpose.msra.mxu0 0
      %505 = vmatprep.subr.bf16.mxu0 0
      %506 = vmatpush1.bf16.xpose.msra.mxu0 0
      %507 = vmatprep.subr.bf16.mxu0 0
      %508 = vmatpush1.bf16.xpose.msra.mxu0 0
      %509 = vmatprep.subr.bf16.mxu0 0
      %510 = vmatpush1.bf16.xpose.msra.mxu0 0
      %511 = vmatprep.subr.bf16.mxu0 0
      %512 = vmatpush1.bf16.xpose.msra.mxu0 0
      %513 = vmatprep.subr.bf16.mxu0 0
      %514 = vmatpush1.bf16.xpose.msra.mxu0 0
      %515 = vmatprep.mubr.bf16.mxu0 0
      %516 = vmatmul.mubr.bf16.gmra.mrb[0].mxu0 %v478
      %v517 = vpop.f32.mrb[0].mxu0
      %v518 = vadd.f32 0.0, %v517
      %v519 = vpop.f32.mrb[0].mxu0
      %v520 = vpop.f32.mrb[0].mxu0
      %v521 = vpop.f32.mrb[0].mxu0
      %522 = vdwg.mxu0
      %v523 = vsel %vm121, %v518, -inf
      %524 = vmax.xlane.f32.xlu0 %v523
      %v525 = vpop.xlane.xlu0 %524
      %v526 = vsub.f32 %v518, %v525
      %v527 = vmul.f32 %v526, 1.442695
      %v528 = vpow.pop %v527
      %v529 = vsel %vm121, %v528, 0.0
      %530 = vadd.xlane.f32.xlu0 %v529
      %v531 = vpop.xlane.xlu0 %530
      %v532 = vrcp.pop %v531
      %v533 = vmul.f32 %v528, %v532
      %v534 = vpack.c.bf16 %v533, %v533
      %535 = vrot.lane.b32.xlu0 %v118, 40
      %v536 = vpop.permute.xlu0 %535
      %v538 = vsel %vm121, %v534, 0
      %v541 = vsel %vm185, %v536, 0
      %543 = vmatprep.subr.bf16.mxu0 0
      %544 = vmatpush1.bf16.msra.mxu0 %v541
      %545 = vmatprep.subr.bf16.mxu0 0
      %546 = vmatpush1.bf16.msra.mxu0 0
      %547 = vmatprep.subr.bf16.mxu0 0
      %548 = vmatpush1.bf16.msra.mxu0 0
      %549 = vmatprep.subr.bf16.mxu0 0
      %550 = vmatpush1.bf16.msra.mxu0 0
      %551 = vmatprep.subr.bf16.mxu0 0
      %552 = vmatpush1.bf16.msra.mxu0 0
      %553 = vmatprep.subr.bf16.mxu0 0
      %554 = vmatpush1.bf16.msra.mxu0 0
      %555 = vmatprep.subr.bf16.mxu0 0
      %556 = vmatpush1.bf16.msra.mxu0 0
      %557 = vmatprep.subr.bf16.mxu0 0
      %558 = vmatpush1.bf16.msra.mxu0 0
      %559 = vmatprep.subr.bf16.mxu0 0
      %560 = vmatpush1.bf16.msra.mxu0 0
      %561 = vmatprep.subr.bf16.mxu0 0
      %562 = vmatpush1.bf16.msra.mxu0 0
      %563 = vmatprep.subr.bf16.mxu0 0
      %564 = vmatpush1.bf16.msra.mxu0 0
      %565 = vmatprep.subr.bf16.mxu0 0
      %566 = vmatpush1.bf16.msra.mxu0 0
      %567 = vmatprep.subr.bf16.mxu0 0
      %568 = vmatpush1.bf16.msra.mxu0 0
      %569 = vmatprep.subr.bf16.mxu0 0
      %570 = vmatpush1.bf16.msra.mxu0 0
      %571 = vmatprep.subr.bf16.mxu0 0
      %572 = vmatpush1.bf16.msra.mxu0 0
      %573 = vmatprep.subr.bf16.mxu0 0
      %574 = vmatpush1.bf16.msra.mxu0 0
      %575 = vmatprep.mubr.bf16.mxu0 0
      %576 = vmatmul.mubr.bf16.gmra.mrb[0].mxu0 %v538
      %v577 = vpop.f32.mrb[0].mxu0
      %v578 = vadd.f32 0.0, %v577
      %v579 = vpop.f32.mrb[0].mxu0
      %v580 = vpop.f32.mrb[0].mxu0
      %v581 = vpop.f32.mrb[0].mxu0
      %582 = vdwg.mxu0
      %v583 = vpack.c.bf16 %v578, %v578
      %v585 = vunpack.c.l.b16 %v583
      %v586 = vpack.c.b16 %v585, %v585
      %587 = vrot.lane.b32.xlu0 %v586, 24
      %v588 = vpop.permute.xlu0 %587
      %vm590 = vcmask 257216
      %591 = vst.msk [vmem:[%s111] sm:$0xf] %vm590, %v588
      %p592 = scmp.lt.s32.totalorder %s12, 1
      %s593 = scalar_select %p592, %s12, 1
      %s594 = smul.addr %s593, 4
      %s595 = scalar_lea.vmem %s1, %s594
      // Predicated region
      $region25: #{bert_timeseries_forward.13} parent=23 // pred_check
        %p596 = pneg %p56
      $region26: #{bert_timeseries_forward.13} parent=23 // pred_check_branch
        %598 = sbr.rel (%p596) target = $region28
      $region27: #{bert_timeseries_forward.13} parent=23 // pred_region
        _
      $region28: #{bert_timeseries_forward.13} parent=23 // pred_fallthru
        _
    $region24: #{bert_timeseries_forward.13} parent=5 // pred_fallthru
      _
    %p599 = scmp.le.s32.totalorder 2, %s7
    // Predicated region
    $region29: #{bert_timeseries_forward.13} parent=5 // pred_check
      %p600 = pneg %p599
    $region30: #{bert_timeseries_forward.13} parent=5 // pred_check_branch
      %602 = sbr.rel (%p600) target = $region32
    $region31: #{bert_timeseries_forward.13} parent=5 // pred_region
      %s603 = ssub.s32 %s7, 2
      // Predicated region
      $region33: #{bert_timeseries_forward.13} parent=31 // pred_check
        %p604 = pneg %p62
      $region34: #{bert_timeseries_forward.13} parent=31 // pred_check_branch
        %606 = sbr.rel (%p604) target = $region36
      $region35: #{bert_timeseries_forward.13} parent=31 // pred_region
        %p607 = scmp.lt.s32.totalorder %s13, 1
        %s608 = scalar_select %p607, %s13, 1
        %s609 = smul.addr %s608, 4
        %s610 = scalar_lea.vmem %s1, %s609
      $region36: #{bert_timeseries_forward.13} parent=31 // pred_fallthru
        _
    $region32: #{bert_timeseries_forward.13} parent=5 // pred_fallthru
      _
  $region6: #{bert_timeseries_forward.13} parent=0 // loop_footer
    %s11 = sadd.s32 1, %s7
  $region7: #{bert_timeseries_forward.13} parent=0 // loop_footer_branch
    %6 = sbr.rel target = $region3
  $region8: #{bert_timeseries_forward.13} parent=0 // loop_exit
    _

// kernel: bert_timeseries_forward.22
$region0: #{bert_timeseries_forward.22}
  #allocation0 [shape = 'u32[]', space=smem, size = 0x4, offset = 0x4, fixed_abs, tag = 'smem constant byte address 0x4 - core index']
  #allocation1 [shape = 'u32[144,128]{1,0:T(1,128)}', space=vmem, size = 0x12000, scoped, tag = 'internal scratch']
  %s0 = inlined_call_operand.vmem [shape: bf16[16,32], index: 0, kind: input, shape index: {}]
  %s1 = inlined_call_operand.vmem [shape: f32[1,32], index: 1, kind: input, shape index: {}]
  %s2 = inlined_call_operand.vmem [shape: f32[1,32], index: 2, kind: input, shape index: {}]
  %s3 = inlined_call_operand.vmem [shape: bf16[16,32], index: 3, kind: output, shape index: {}]
  %s4 = sld [smem:[#allocation0]]
  $region22: #{bert_timeseries_forward.22} parent=0
    _
  %s6 = ssub.s32 1, %s4
  %s7 = scalar_select 0, %s6, %s4
  // Predicated region
  $region2: #{bert_timeseries_forward.22} parent=0 // pred_check
    _
  $region3: #{bert_timeseries_forward.22} parent=0 // pred_check_branch
    %9 = sbr.rel (0) target = $region5
  $region4: #{bert_timeseries_forward.22} parent=0 // pred_region
    _
  $region5: #{bert_timeseries_forward.22} parent=0 // pred_fallthru
    _
  // Predicated region
  $region6: #{bert_timeseries_forward.22} parent=0 // pred_check
    _
  $region7: #{bert_timeseries_forward.22} parent=0 // pred_check_branch
    %11 = sbr.rel (0) target = $region9
  $region8: #{bert_timeseries_forward.22} parent=0 // pred_region
    _
  $region9: #{bert_timeseries_forward.22} parent=0 // pred_fallthru
    _
  // Predicated region
  $region10: #{bert_timeseries_forward.22} parent=0 // pred_check
    _
  $region11: #{bert_timeseries_forward.22} parent=0 // pred_check_branch
    %13 = sbr.rel (0) target = $region13
  $region12: #{bert_timeseries_forward.22} parent=0 // pred_region
    _
  $region13: #{bert_timeseries_forward.22} parent=0 // pred_fallthru
    _
  %v14 = vld [vmem:[%s0] sm:$0xf]
  %v15 = vld [vmem:[%s0 + $0x4] sm:$0xf]
  %v16 = vunpack.c.l.bf16 %v14
  %v17 = vunpack.c.l.bf16 %v15
  %vm18 = vcmask 261120
  %v19 = vsel %vm18, %v16, 0.0
  %20 = vadd.xlane.f32.xlu0 %v19
  %v21 = vpop.xlane.xlu0 %20
  %v22 = vsel %vm18, %v17, 0.0
  %23 = vadd.xlane.f32.xlu0 %v22
  %v24 = vpop.xlane.xlu0 %23
  %v25 = vrcp.pop 32.0
  %v26 = vmul.f32 %v21, %v25
  %v27 = vmul.f32 %v24, %v25
  %v28 = vsub.f32 %v16, %v26
  %v29 = vsub.f32 %v17, %v27
  %v30 = vmul.f32 %v28, %v28
  %v31 = vmul.f32 %v29, %v29
  %v32 = vsel %vm18, %v30, 0.0
  %33 = vadd.xlane.f32.xlu0 %v32
  %v34 = vpop.xlane.xlu0 %33
  %v35 = vsel %vm18, %v31, 0.0
  %36 = vadd.xlane.f32.xlu0 %v35
  %v37 = vpop.xlane.xlu0 %36
  %v38 = vmul.f32 %v34, %v25
  %v39 = vmul.f32 %v37, %v25
  %v40 = vadd.f32 %v38, 1e-05
  %v41 = vadd.f32 %v39, 1e-05
  %v42 = vrsqrt.pop %v40
  %v43 = vrsqrt.pop %v41
  %v44 = vmul.f32 %v28, %v42
  %v45 = vmul.f32 %v29, %v43
  %v46 = vld [vmem:[%s1] sm:$0x1]
  %v48 = vlaneseq
  %v49 = vshrl.u32 %v48, 7
  %v50 = vsub.s32 0, %v49
  %v51 = vrot.slane %v46, %v50
  %v53 = vmul.f32 %v44, %v51
  %v54 = vmul.f32 %v45, %v51
  %v55 = vld [vmem:[%s2] sm:$0x1]
  %v57 = vlaneseq
  %v58 = vshrl.u32 %v57, 7
  %v59 = vsub.s32 0, %v58
  %v60 = vrot.slane %v55, %v59
  %v62 = vadd.f32 %v53, %v60
  %v63 = vadd.f32 %v54, %v60
  %v64 = vpack.c.bf16 %v63, %v62
  %v66 = vunpack.c.l.b16 %v64
  %v67 = vunpack.c.h.b16 %v64
  %v68 = vpack.c.b16 %v66, %v66
  %v69 = vpack.c.b16 %v67, %v67
  %vm72 = vcmask 257024
  %73 = vst.msk [vmem:[%s3] sm:$0xf] %vm72, %v68
  %74 = vst.msk [vmem:[%s3 + $0x4] sm:$0xf] %vm72, %v69
  // Predicated region
  $region14: #{bert_timeseries_forward.22} parent=0 // pred_check
    _
  $region15: #{bert_timeseries_forward.22} parent=0 // pred_check_branch
    %76 = sbr.rel (0) target = $region17
  $region16: #{bert_timeseries_forward.22} parent=0 // pred_region
    _
  $region17: #{bert_timeseries_forward.22} parent=0 // pred_fallthru
    _
  // Predicated region
  $region18: #{bert_timeseries_forward.22} parent=0 // pred_check
    _
  $region19: #{bert_timeseries_forward.22} parent=0 // pred_check_branch
    %78 = sbr.rel (0) target = $region21
  $region20: #{bert_timeseries_forward.22} parent=0 // pred_region
    _
  $region21: #{bert_timeseries_forward.22} parent=0 // pred_fallthru
    _

// kernel: bert_timeseries_forward.16
$region0: #{bert_timeseries_forward.16}
  #allocation0 [shape = 'u32[]', space=smem, size = 0x4, offset = 0x4, fixed_abs, tag = 'smem constant byte address 0x4 - core index']
  #allocation1 [shape = 'u32[144,128]{1,0:T(1,128)}', space=vmem, size = 0x12000, scoped, tag = 'internal scratch']
  #allocation2 [shape = 'f32[16,32]{1,0:T(8,128)}', space=vmem, size = 0x2000, scoped, tag = 'scratch operand']
  %s0 = inlined_call_operand.vmem [shape: bf16[16,64], index: 0, kind: input, shape index: {}]
  %s1 = inlined_call_operand.vmem [shape: bf16[64,32], index: 1, kind: input, shape index: {}]
  %s2 = inlined_call_operand.vmem [shape: f32[1,32], index: 2, kind: input, shape index: {}]
  %s3 = inlined_call_operand.vmem [shape: bf16[16,32], index: 3, kind: input, shape index: {}]
  %s4 = inlined_call_operand.vmem [shape: f32[1,32], index: 4, kind: input, shape index: {}]
  %s5 = inlined_call_operand.vmem [shape: f32[1,32], index: 5, kind: input, shape index: {}]
  %s6 = inlined_call_operand.vmem [shape: bf16[16,32], index: 6, kind: output, shape index: {}]
  %s7 = sld [smem:[#allocation0]]
  $region42: #{bert_timeseries_forward.16} parent=0
    _
  %s9 = ssub.s32 1, %s7
  %s10 = scalar_select 0, %s9, %s7
  // Predicated region
  $region2: #{bert_timeseries_forward.16} parent=0 // pred_check
    _
  $region3: #{bert_timeseries_forward.16} parent=0 // pred_check_branch
    %12 = sbr.rel (0) target = $region5
  $region4: #{bert_timeseries_forward.16} parent=0 // pred_region
    _
  $region5: #{bert_timeseries_forward.16} parent=0 // pred_fallthru
    _
  // Predicated region
  $region6: #{bert_timeseries_forward.16} parent=0 // pred_check
    _
  $region7: #{bert_timeseries_forward.16} parent=0 // pred_check_branch
    %14 = sbr.rel (0) target = $region9
  $region8: #{bert_timeseries_forward.16} parent=0 // pred_region
    _
  $region9: #{bert_timeseries_forward.16} parent=0 // pred_fallthru
    _
  // Predicated region
  $region10: #{bert_timeseries_forward.16} parent=0 // pred_check
    _
  $region11: #{bert_timeseries_forward.16} parent=0 // pred_check_branch
    %16 = sbr.rel (0) target = $region13
  $region12: #{bert_timeseries_forward.16} parent=0 // pred_region
    _
  $region13: #{bert_timeseries_forward.16} parent=0 // pred_fallthru
    _
  // Predicated region
  $region14: #{bert_timeseries_forward.16} parent=0 // pred_check
    _
  $region15: #{bert_timeseries_forward.16} parent=0 // pred_check_branch
    %18 = sbr.rel (0) target = $region17
  $region16: #{bert_timeseries_forward.16} parent=0 // pred_region
    _
  $region17: #{bert_timeseries_forward.16} parent=0 // pred_fallthru
    _
  // Predicated region
  $region18: #{bert_timeseries_forward.16} parent=0 // pred_check
    _
  $region19: #{bert_timeseries_forward.16} parent=0 // pred_check_branch
    %20 = sbr.rel (0) target = $region21
  $region20: #{bert_timeseries_forward.16} parent=0 // pred_region
    _
  $region21: #{bert_timeseries_forward.16} parent=0 // pred_fallthru
    _
  // Predicated region
  $region22: #{bert_timeseries_forward.16} parent=0 // pred_check
    _
  $region23: #{bert_timeseries_forward.16} parent=0 // pred_check_branch
    %22 = sbr.rel (0) target = $region25
  $region24: #{bert_timeseries_forward.16} parent=0 // pred_region
    _
  $region25: #{bert_timeseries_forward.16} parent=0 // pred_fallthru
    _
  %p24 = scmp.eq.s32.totalorder 0, 0
  // Predicated region
  $region26: #{bert_timeseries_forward.16} parent=0 // pred_check
    %p25 = pneg %p24
  $region27: #{bert_timeseries_forward.16} parent=0 // pred_check_branch
    %27 = sbr.rel (%p25) target = $region29
  $region28: #{bert_timeseries_forward.16} parent=0 // pred_region
    %vm28 = vcmask 261120
    %29 = vst.msk [vmem:[#allocation2] sm:$0xff] %vm28, 0.0
    %30 = vst.msk [vmem:[#allocation2 + $0x8] sm:$0xff] %vm28, 0.0
  $region29: #{bert_timeseries_forward.16} parent=0 // pred_fallthru
    _
  %v31 = vld [vmem:[#allocation2] sm:$0xff]
  %v32 = vld [vmem:[#allocation2 + $0x8] sm:$0xff]
  %v33 = vld [vmem:[%s0] sm:$0xf]
  %v34 = vld [vmem:[%s0 + $0x4] sm:$0xf]
  %v35 = vld [vmem:[%s1] sm:$0xf]
  %v36 = vld [vmem:[%s1 + $0x4] sm:$0xf]
  %v37 = vld [vmem:[%s1 + $0x8] sm:$0xf]
  %v38 = vld [vmem:[%s1 + $0xc] sm:$0xf]
  %v39 = vld [vmem:[%s1 + $0x10] sm:$0xf]
  %v40 = vld [vmem:[%s1 + $0x14] sm:$0xf]
  %v41 = vld [vmem:[%s1 + $0x18] sm:$0xf]
  %v42 = vld [vmem:[%s1 + $0x1c] sm:$0xf]
  %v45 = vunpack.c.l.b16 %v33
  %v46 = vunpack.c.l.b16 %v34
  %v47 = vpack.c.b16 %v46, %v45
  %v56 = vunpack.c.l.b16 %v35
  %v57 = vunpack.c.l.b16 %v36
  %v58 = vunpack.c.l.b16 %v37
  %v59 = vunpack.c.l.b16 %v38
  %v60 = vunpack.c.l.b16 %v39
  %v61 = vunpack.c.l.b16 %v40
  %v62 = vunpack.c.l.b16 %v41
  %v63 = vunpack.c.l.b16 %v42
  %v64 = vpack.c.b16 %v57, %v56
  %v65 = vpack.c.b16 %v59, %v58
  %v66 = vpack.c.b16 %v61, %v60
  %v67 = vpack.c.b16 %v63, %v62
  %vm72 = vcmask 523264
  %v74 = vsel %vm72, %v47, 0
  %76 = vmatprep.subr.bf16.mxu0 0
  %77 = vmatpush1.bf16.msra.mxu0 %v64
  %78 = vmatprep.subr.bf16.mxu0 0
  %79 = vmatpush1.bf16.msra.mxu0 %v65
  %80 = vmatprep.subr.bf16.mxu0 0
  %81 = vmatpush1.bf16.msra.mxu0 %v66
  %82 = vmatprep.subr.bf16.mxu0 0
  %83 = vmatpush1.bf16.msra.mxu0 %v67
  %84 = vmatprep.subr.bf16.mxu0 0
  %85 = vmatpush1.bf16.msra.mxu0 0
  %86 = vmatprep.subr.bf16.mxu0 0
  %87 = vmatpush1.bf16.msra.mxu0 0
  %88 = vmatprep.subr.bf16.mxu0 0
  %89 = vmatpush1.bf16.msra.mxu0 0
  %90 = vmatprep.subr.bf16.mxu0 0
  %91 = vmatpush1.bf16.msra.mxu0 0
  %92 = vmatprep.subr.bf16.mxu0 0
  %93 = vmatpush1.bf16.msra.mxu0 0
  %94 = vmatprep.subr.bf16.mxu0 0
  %95 = vmatpush1.bf16.msra.mxu0 0
  %96 = vmatprep.subr.bf16.mxu0 0
  %97 = vmatpush1.bf16.msra.mxu0 0
  %98 = vmatprep.subr.bf16.mxu0 0
  %99 = vmatpush1.bf16.msra.mxu0 0
  %100 = vmatprep.subr.bf16.mxu0 0
  %101 = vmatpush1.bf16.msra.mxu0 0
  %102 = vmatprep.subr.bf16.mxu0 0
  %103 = vmatpush1.bf16.msra.mxu0 0
  %104 = vmatprep.subr.bf16.mxu0 0
  %105 = vmatpush1.bf16.msra.mxu0 0
  %106 = vmatprep.subr.bf16.mxu0 0
  %107 = vmatpush1.bf16.msra.mxu0 0
  %108 = vmatprep.mubr.bf16.mxu0 0
  %109 = vmatmul.mubr.bf16.gmra.mrb[0].mxu0 %v74
  %v110 = vpop.f32.mrb[0].mxu0
  %v111 = vadd.f32 0.0, %v110
  %v112 = vpop.f32.mrb[0].mxu0
  %v113 = vpop.f32.mrb[0].mxu0
  %v114 = vadd.f32 0.0, %v113
  %v115 = vpop.f32.mrb[0].mxu0
  %116 = vdwg.mxu0
  %v117 = vadd.f32 %v31, %v111
  %v118 = vadd.f32 %v32, %v114
  %vm119 = vcmask 261120
  %120 = vst.msk [vmem:[#allocation2] sm:$0xff] %vm119, %v117
  %121 = vst.msk [vmem:[#allocation2 + $0x8] sm:$0xff] %vm119, %v118
  // Predicated region
  $region30: #{bert_timeseries_forward.16} parent=0 // pred_check
    %p122 = pneg %p24
  $region31: #{bert_timeseries_forward.16} parent=0 // pred_check_branch
    %124 = sbr.rel (%p122) target = $region33
  $region32: #{bert_timeseries_forward.16} parent=0 // pred_region
    %v125 = vld [vmem:[#allocation2] sm:$0xff]
    %v126 = vld [vmem:[#allocation2 + $0x8] sm:$0xff]
    %v127 = vld [vmem:[%s2] sm:$0x1]
    %v129 = vlaneseq
    %v130 = vshrl.u32 %v129, 7
    %v131 = vsub.s32 0, %v130
    %v132 = vrot.slane %v127, %v131
    %v134 = vadd.f32 %v125, %v132
    %v135 = vadd.f32 %v126, %v132
    %v136 = vld [vmem:[%s3] sm:$0xf]
    %v137 = vld [vmem:[%s3 + $0x4] sm:$0xf]
    %v138 = vunpack.c.l.bf16 %v136
    %v139 = vunpack.c.l.bf16 %v137
    %v140 = vadd.f32 %v134, %v138
    %v141 = vadd.f32 %v135, %v139
    %v142 = vsel %vm119, %v140, 0.0
    %143 = vadd.xlane.f32.xlu0 %v142
    %v144 = vpop.xlane.xlu0 %143
    %v145 = vsel %vm119, %v141, 0.0
    %146 = vadd.xlane.f32.xlu0 %v145
    %v147 = vpop.xlane.xlu0 %146
    %v148 = vrcp.pop 32.0
    %v149 = vmul.f32 %v144, %v148
    %v150 = vmul.f32 %v147, %v148
    %v151 = vsub.f32 %v140, %v149
    %v152 = vsub.f32 %v141, %v150
    %v153 = vmul.f32 %v151, %v151
    %v154 = vmul.f32 %v152, %v152
    %v155 = vsel %vm119, %v153, 0.0
    %156 = vadd.xlane.f32.xlu0 %v155
    %v157 = vpop.xlane.xlu0 %156
    %v158 = vsel %vm119, %v154, 0.0
    %159 = vadd.xlane.f32.xlu0 %v158
    %v160 = vpop.xlane.xlu0 %159
    %v161 = vmul.f32 %v157, %v148
    %v162 = vmul.f32 %v160, %v148
    %v163 = vadd.f32 %v161, 1e-05
    %v164 = vadd.f32 %v162, 1e-05
    %v165 = vrsqrt.pop %v163
    %v166 = vrsqrt.pop %v164
    %v167 = vmul.f32 %v151, %v165
    %v168 = vmul.f32 %v152, %v166
    %v169 = vld [vmem:[%s4] sm:$0x1]
    %v171 = vlaneseq
    %v172 = vshrl.u32 %v171, 7
    %v173 = vsub.s32 0, %v172
    %v174 = vrot.slane %v169, %v173
    %v176 = vmul.f32 %v167, %v174
    %v177 = vmul.f32 %v168, %v174
    %v178 = vld [vmem:[%s5] sm:$0x1]
    %v180 = vlaneseq
    %v181 = vshrl.u32 %v180, 7
    %v182 = vsub.s32 0, %v181
    %v183 = vrot.slane %v178, %v182
    %v185 = vadd.f32 %v176, %v183
    %v186 = vadd.f32 %v177, %v183
    %v187 = vpack.c.bf16 %v186, %v185
    %v189 = vunpack.c.l.b16 %v187
    %v190 = vunpack.c.h.b16 %v187
    %v191 = vpack.c.b16 %v189, %v189
    %v192 = vpack.c.b16 %v190, %v190
    %vm195 = vcmask 257024
    %196 = vst.msk [vmem:[%s6] sm:$0xf] %vm195, %v191
    %197 = vst.msk [vmem:[%s6 + $0x4] sm:$0xf] %vm195, %v192
  $region33: #{bert_timeseries_forward.16} parent=0 // pred_fallthru
    _
  // Predicated region
  $region34: #{bert_timeseries_forward.16} parent=0 // pred_check
    _
  $region35: #{bert_timeseries_forward.16} parent=0 // pred_check_branch
    %199 = sbr.rel (0) target = $region37
  $region36: #{bert_timeseries_forward.16} parent=0 // pred_region
    _
  $region37: #{bert_timeseries_forward.16} parent=0 // pred_fallthru
    _
  // Predicated region
  $region38: #{bert_timeseries_forward.16} parent=0 // pred_check
    _
  $region39: #{bert_timeseries_forward.16} parent=0 // pred_check_branch
    %201 = sbr.rel (0) target = $region41
  $region40: #{bert_timeseries_forward.16} parent=0 // pred_region
    _
  $region41: #{bert_timeseries_forward.16} parent=0 // pred_fallthru
    _

// kernel: bert_timeseries_forward.23
$region0: #{bert_timeseries_forward.23}
  #allocation0 [shape = 'u32[]', space=smem, size = 0x4, offset = 0x4, fixed_abs, tag = 'smem constant byte address 0x4 - core index']
  #allocation1 [shape = 'u32[144,128]{1,0:T(1,128)}', space=vmem, size = 0x12000, scoped, tag = 'internal scratch']
  #allocation2 [shape = 'f32[16,128]{1,0:T(8,128)}', space=vmem, size = 0x2000, scoped, tag = 'scratch operand']
  %s0 = inlined_call_operand.vmem [shape: bf16[16,32], index: 0, kind: input, shape index: {}]
  %s1 = inlined_call_operand.vmem [shape: bf16[32,128], index: 1, kind: input, shape index: {}]
  %s2 = inlined_call_operand.vmem [shape: f32[1,128], index: 2, kind: input, shape index: {}]
  %s3 = inlined_call_operand.vmem [shape: f32[16,128], index: 3, kind: output, shape index: {}]
  %s4 = sld [smem:[#allocation0]]
  $region30: #{bert_timeseries_forward.23} parent=0
    _
  %s6 = ssub.s32 1, %s4
  %s7 = scalar_select 0, %s6, %s4
  // Predicated region
  $region2: #{bert_timeseries_forward.23} parent=0 // pred_check
    _
  $region3: #{bert_timeseries_forward.23} parent=0 // pred_check_branch
    %9 = sbr.rel (0) target = $region5
  $region4: #{bert_timeseries_forward.23} parent=0 // pred_region
    _
  $region5: #{bert_timeseries_forward.23} parent=0 // pred_fallthru
    _
  // Predicated region
  $region6: #{bert_timeseries_forward.23} parent=0 // pred_check
    _
  $region7: #{bert_timeseries_forward.23} parent=0 // pred_check_branch
    %11 = sbr.rel (0) target = $region9
  $region8: #{bert_timeseries_forward.23} parent=0 // pred_region
    _
  $region9: #{bert_timeseries_forward.23} parent=0 // pred_fallthru
    _
  // Predicated region
  $region10: #{bert_timeseries_forward.23} parent=0 // pred_check
    _
  $region11: #{bert_timeseries_forward.23} parent=0 // pred_check_branch
    %13 = sbr.rel (0) target = $region13
  $region12: #{bert_timeseries_forward.23} parent=0 // pred_region
    _
  $region13: #{bert_timeseries_forward.23} parent=0 // pred_fallthru
    _
  %p15 = scmp.eq.s32.totalorder 0, 0
  // Predicated region
  $region14: #{bert_timeseries_forward.23} parent=0 // pred_check
    %p16 = pneg %p15
  $region15: #{bert_timeseries_forward.23} parent=0 // pred_check_branch
    %18 = sbr.rel (%p16) target = $region17
  $region16: #{bert_timeseries_forward.23} parent=0 // pred_region
    %19 = vst [vmem:[#allocation2] sm:$0xff] 0.0
    %20 = vst [vmem:[#allocation2 + $0x8] sm:$0xff] 0.0
  $region17: #{bert_timeseries_forward.23} parent=0 // pred_fallthru
    _
  %v21 = vld [vmem:[#allocation2] sm:$0xff]
  %v22 = vld [vmem:[#allocation2 + $0x8] sm:$0xff]
  %v23 = vld [vmem:[%s0] sm:$0xf]
  %v24 = vld [vmem:[%s0 + $0x4] sm:$0xf]
  %v25 = vld [vmem:[%s1] sm:$0xf]
  %v26 = vld [vmem:[%s1 + $0x4] sm:$0xf]
  %v27 = vld [vmem:[%s1 + $0x8] sm:$0xf]
  %v28 = vld [vmem:[%s1 + $0xc] sm:$0xf]
  %v31 = vunpack.c.l.b16 %v23
  %v32 = vunpack.c.l.b16 %v24
  %v33 = vpack.c.b16 %v32, %v31
  %v38 = vunpack.c.l.b16 %v25
  %v39 = vunpack.c.l.b16 %v26
  %v40 = vunpack.c.l.b16 %v27
  %v41 = vunpack.c.l.b16 %v28
  %v42 = vpack.c.b16 %v39, %v38
  %v43 = vpack.c.b16 %v41, %v40
  %vm46 = vcmask 261120
  %v48 = vsel %vm46, %v33, 0
  %50 = vmatprep.subr.bf16.mxu0 0
  %51 = vmatpush1.bf16.msra.mxu0 %v42
  %52 = vmatprep.subr.bf16.mxu0 0
  %53 = vmatpush1.bf16.msra.mxu0 %v43
  %54 = vmatprep.subr.bf16.mxu0 0
  %55 = vmatpush1.bf16.msra.mxu0 0
  %56 = vmatprep.subr.bf16.mxu0 0
  %57 = vmatpush1.bf16.msra.mxu0 0
  %58 = vmatprep.subr.bf16.mxu0 0
  %59 = vmatpush1.bf16.msra.mxu0 0
  %60 = vmatprep.subr.bf16.mxu0 0
  %61 = vmatpush1.bf16.msra.mxu0 0
  %62 = vmatprep.subr.bf16.mxu0 0
  %63 = vmatpush1.bf16.msra.mxu0 0
  %64 = vmatprep.subr.bf16.mxu0 0
  %65 = vmatpush1.bf16.msra.mxu0 0
  %66 = vmatprep.subr.bf16.mxu0 0
  %67 = vmatpush1.bf16.msra.mxu0 0
  %68 = vmatprep.subr.bf16.mxu0 0
  %69 = vmatpush1.bf16.msra.mxu0 0
  %70 = vmatprep.subr.bf16.mxu0 0
  %71 = vmatpush1.bf16.msra.mxu0 0
  %72 = vmatprep.subr.bf16.mxu0 0
  %73 = vmatpush1.bf16.msra.mxu0 0
  %74 = vmatprep.subr.bf16.mxu0 0
  %75 = vmatpush1.bf16.msra.mxu0 0
  %76 = vmatprep.subr.bf16.mxu0 0
  %77 = vmatpush1.bf16.msra.mxu0 0
  %78 = vmatprep.subr.bf16.mxu0 0
  %79 = vmatpush1.bf16.msra.mxu0 0
  %80 = vmatprep.subr.bf16.mxu0 0
  %81 = vmatpush1.bf16.msra.mxu0 0
  %82 = vmatprep.mubr.bf16.mxu0 0
  %83 = vmatmul.mubr.bf16.gmra.mrb[0].mxu0 %v48
  %v84 = vpop.f32.mrb[0].mxu0
  %v85 = vadd.f32 0.0, %v84
  %v86 = vpop.f32.mrb[0].mxu0
  %v87 = vpop.f32.mrb[0].mxu0
  %v88 = vadd.f32 0.0, %v87
  %v89 = vpop.f32.mrb[0].mxu0
  %90 = vdwg.mxu0
  %v91 = vadd.f32 %v21, %v85
  %v92 = vadd.f32 %v22, %v88
  %93 = vst [vmem:[#allocation2] sm:$0xff] %v91
  %94 = vst [vmem:[#allocation2 + $0x8] sm:$0xff] %v92
  // Predicated region
  $region18: #{bert_timeseries_forward.23} parent=0 // pred_check
    %p95 = pneg %p15
  $region19: #{bert_timeseries_forward.23} parent=0 // pred_check_branch
    %97 = sbr.rel (%p95) target = $region21
  $region20: #{bert_timeseries_forward.23} parent=0 // pred_region
    %v98 = vld [vmem:[#allocation2] sm:$0xff]
    %v99 = vld [vmem:[#allocation2 + $0x8] sm:$0xff]
    %v100 = vld [vmem:[%s2] sm:$0x1]
    %v102 = vlaneseq
    %v103 = vshrl.u32 %v102, 7
    %v104 = vsub.s32 0, %v103
    %v105 = vrot.slane %v100, %v104
    %v107 = vadd.f32 %v98, %v105
    %v108 = vadd.f32 %v99, %v105
    %109 = vst [vmem:[%s3] sm:$0xff] %v107
    %110 = vst [vmem:[%s3 + $0x8] sm:$0xff] %v108
  $region21: #{bert_timeseries_forward.23} parent=0 // pred_fallthru
    _
  // Predicated region
  $region22: #{bert_timeseries_forward.23} parent=0 // pred_check
    _
  $region23: #{bert_timeseries_forward.23} parent=0 // pred_check_branch
    %112 = sbr.rel (0) target = $region25
  $region24: #{bert_timeseries_forward.23} parent=0 // pred_region
    _
  $region25: #{bert_timeseries_forward.23} parent=0 // pred_fallthru
    _
  // Predicated region
  $region26: #{bert_timeseries_forward.23} parent=0 // pred_check
    _
  $region27: #{bert_timeseries_forward.23} parent=0 // pred_check_branch
    %114 = sbr.rel (0) target = $region29
  $region28: #{bert_timeseries_forward.23} parent=0 // pred_region
    _
  $region29: #{bert_timeseries_forward.23} parent=0 // pred_fallthru
    _

</llo_original>
